<compile_context>
chip_gen: v5e
topology: v5e:2x2
jax: 0.10.0
libtpu: 0.0.40
codegen_flags: <defaults>
</compile_context>

<pallas_src>
import functools

import jax
import jax.numpy as jnp
from jax import lax
from jax.experimental import pallas as pl
from jax.experimental.pallas import tpu as pltpu


def generate_restriction_strides(n, reverse=False):
    strides = [1, 2] * 10
    return list(reversed(strides[:n])) if reverse else strides[:n]


def _vmem_limit_bytes():
    """75% of physical VMEM: ~96 MiB on v5e/v6e (128 MiB), ~48 MiB on v7x."""
    try:
        cap = int(pltpu.get_tpu_info().vmem_capacity_bytes)
    except Exception:
        cap = 64 * 1024 * 1024          # conservative fallback, safe everywhere
    return (cap * 3) // 4


# ---------------------------------------------------------------------------
# Fused per-layer kernel.  One grid step covers `samples_per_block` whole
# samples (lane axis = sample-major flattened pixels, always a full-lane
# multiple of 128 at these shapes):
#   y = W[Cout, D_pad] @ P[D_pad, lanes] + bias      (MXU, bf16 in / f32 acc)
#   per-(sample, group) GroupNorm via lane/sublane masks (two-pass, f32)
#   LeakyReLU(0.2), single cast at the store.
# ---------------------------------------------------------------------------
def _restriction_kernel(p_ref, w_ref, prm_ref, o_ref, *,
                        act_norm, num_norm_groups, eps, neg_slope,
                        hw, samples_per_block):
    # p_ref  : (D_pad, lanes) bf16 im2col patches for `samples_per_block` samples
    # w_ref  : (Cout, D_pad)  bf16 conv weights          (resident across grid)
    # prm_ref: (Cout, 3)      f32  packed [bias|gamma|beta]        (resident)
    # o_ref  : (Cout, lanes)  layer output (bf16 for inner layers)
    y = jnp.dot(w_ref[...], p_ref[...],
                preferred_element_type=jnp.float32)           # [Cout, lanes] f32
    y = y + prm_ref[:, 0:1]                                   # conv bias

    if act_norm:
        c, lanes = y.shape
        cg = c // num_norm_groups
        row = lax.broadcasted_iota(jnp.int32, (c, lanes), 0)
        lane = lax.broadcasted_iota(jnp.int32, (c, lanes), 1)
        inv_cnt = 1.0 / float(cg * hw)

        y_n = y
        for g in range(num_norm_groups):                      # static, tiny
            g_mask = (row >= g * cg) & (row < (g + 1) * cg)
            for s in range(samples_per_block):                 # static, tiny
                m = g_mask & (lane >= s * hw) & (lane < (s + 1) * hw)
                ym = jnp.where(m, y, 0.0)
                # two-pass stats (mean, then centered sumsq) -> no cancellation
                mu = jnp.sum(jnp.sum(ym, axis=1, keepdims=True),
                             axis=0, keepdims=True) * inv_cnt            # [1,1]
                d = jnp.where(m, y - mu, 0.0)
                var = jnp.sum(jnp.sum(d * d, axis=1, keepdims=True),
                              axis=0, keepdims=True) * inv_cnt           # [1,1]
                y_n = jnp.where(m, (y - mu) * lax.rsqrt(var + eps), y_n)

        y = y_n * prm_ref[:, 1:2] + prm_ref[:, 2:3]           # GN affine
        y = jnp.where(y > 0, y, neg_slope * y)                # LeakyReLU(0.2)

    o_ref[...] = y.astype(o_ref.dtype)


def restriction_operator(x_cnhw, weight, bias, gamma, beta, *, stride,
                         act_norm=True, num_norm_groups=2, eps=1e-5,
                         neg_slope=0.2, kernel_size=3, padding=1,
                         compute_dtype=jnp.bfloat16, out_dtype=jnp.bfloat16):
    """One RestrictionOperator layer on channels-leading activations.

    x_cnhw: [Cin, N, H, W]  ->  returns [Cout, N, Ho, Wo] (out_dtype).
    """
    Cin, N, H, W = x_cnhw.shape
    Cout = weight.shape[0]
    K = kernel_size
    assert Cout % num_norm_groups == 0, (Cout, num_norm_groups)
    Ho = (H + 2 * padding - K) // stride + 1
    Wo = (W + 2 * padding - K) // stride + 1
    HW = Ho * Wo
    D = Cin * K * K
    D_pad = ((D + 15) // 16) * 16         # bf16 sublane-tile alignment

    # im2col (channels-leading) -> lane-dense [D_pad, N*HW] patches in bf16.
    # The pad/gather producer is a candidate for input fusion into the kernel.
    xp = jnp.pad(x_cnhw.astype(compute_dtype),
                 ((0, 0), (0, 0), (padding, padding), (padding, padding)))
    cols = [xp[:, :, ki:ki + stride * Ho:stride, kj:kj + stride * Wo:stride]
            for ki in range(K) for kj in range(K)]             # [Cin, N, Ho, Wo]
    patches = jnp.stack(cols, axis=1).reshape(D, N * HW)       # d = c*9 + ki*3 + kj
    if D_pad != D:
        patches = jnp.pad(patches, ((0, D_pad - D), (0, 0)))

    w_mat = weight.reshape(Cout, D).astype(compute_dtype)      # matches OIHW flatten
    if D_pad != D:
        w_mat = jnp.pad(w_mat, ((0, 0), (0, D_pad - D)))
    params = jnp.stack([bias, gamma, beta], axis=1).astype(jnp.float32)  # [Cout,3]

    # Whole samples per block; fold samples when HW < 128 so the lane width of
    # every block is >= 128 and a multiple of 128 (unmasked stores).
    if HW % 128 == 0:
        spb = 1
    else:
        spb = min(max(1, 128 // HW), N)
        while N % spb != 0:
            spb -= 1
        if (spb * HW) % 128 != 0:
            spb = N                       # single block == full lane extent
    Lb = spb * HW
    num_blocks = N // spb

    kern = functools.partial(_restriction_kernel, act_norm=act_norm,
                             num_norm_groups=num_norm_groups, eps=eps,
                             neg_slope=neg_slope, hw=HW, samples_per_block=spb)

    patch_spec_kwargs = {}
    if num_blocks >= 4:
        # Deeper prefetch only pays off once the grid is deep enough to hide DMA.
        patch_spec_kwargs["pipeline_mode"] = pl.Buffered(3)

    out_itemsize = jnp.dtype(out_dtype).itemsize
    cost = pl.CostEstimate(
        flops=2 * Cout * D * N * HW,
        transcendentals=num_norm_groups * spb * num_blocks,
        bytes_accessed=(patches.size * patches.dtype.itemsize
                        + w_mat.size * w_mat.dtype.itemsize
                        + params.size * params.dtype.itemsize
                        + Cout * N * HW * out_itemsize))

    out = pl.pallas_call(
        kern,
        out_shape=jax.ShapeDtypeStruct((Cout, N * HW), out_dtype),
        grid=(num_blocks,),
        in_specs=[
            pl.BlockSpec((D_pad, Lb), lambda b: (0, b), **patch_spec_kwargs),
            pl.BlockSpec((Cout, D_pad), lambda b: (0, 0)),   # weights resident
            pl.BlockSpec((Cout, 3), lambda b: (0, 0)),       # bias/gamma/beta resident
        ],
        out_specs=pl.BlockSpec((Cout, Lb), lambda b: (0, b)),
        compiler_params=pltpu.CompilerParams(
            dimension_semantics=("parallel",),
            vmem_limit_bytes=_vmem_limit_bytes(),
            # allow XLA to fuse the im2col pad/gather producer into the patch
            # operand (per-operand booleans: patches yes, weights/params no).
            allow_input_fusion=[True, False, False],
        ),
        cost_estimate=cost,
    )(patches, w_mat, params)

    # Lane-dense [Cout, N*HW] -> [Cout, N, Ho, Wo]: pure reshape, no transpose,
    # and it is already the next layer's expected (channels-leading) layout.
    return out.reshape(Cout, N, Ho, Wo)


def multi_grid_encoder(x, layer_params, strides):
    """MultiGridEncoder.forward: x [N,C,H,W] f32 -> (latent, enc1) in NCHW f32."""
    x_c = jnp.transpose(x, (1, 0, 2, 3))          # one transpose in, bf16 inside
    enc1_c = None
    latent_c = x_c
    n_layers = len(strides)
    for i, (p, s) in enumerate(zip(layer_params, strides)):
        is_last = (i == n_layers - 1)
        latent_c = restriction_operator(
            latent_c, p["weight"], p["bias"], p["gamma"], p["beta"], stride=s,
            out_dtype=jnp.float32 if is_last else jnp.bfloat16)
        if i == 0:
            enc1_c = latent_c

    def to_nchw(t):
        return jnp.transpose(t, (1, 0, 2, 3)).astype(jnp.float32)

    return to_nchw(latent_c), to_nchw(enc1_c)


# ---------------------------------------------------------------------------
# Plain-JAX f32 reference (mirrors the PyTorch module) for validation.
# ---------------------------------------------------------------------------
def _reference_encoder(x, layer_params, strides, eps=1e-5, neg_slope=0.2):
    def layer(h, p, s):
        y = lax.conv_general_dilated(
            h, p["weight"], window_strides=(s, s),
            padding=[(1, 1), (1, 1)],
            dimension_numbers=("NCHW", "OIHW", "NCHW"),
            precision=lax.Precision.HIGHEST)
        y = y + p["bias"][None, :, None, None]
        N, C, H, W = y.shape
        yg = y.reshape(N, 2, -1)
        mean = jnp.mean(yg, axis=-1, keepdims=True)
        var = jnp.mean((yg - mean) ** 2, axis=-1, keepdims=True)
        yg = (yg - mean) / jnp.sqrt(var + eps)
        y = (yg.reshape(N, C, H, W) * p["gamma"][None, :, None, None]
             + p["beta"][None, :, None, None])
        return jnp.where(y > 0, y, neg_slope * y)

    enc1 = None
    latent = x
    for i, (p, s) in enumerate(zip(layer_params, strides)):
        latent = layer(latent, p, s)
        if i == 0:
            enc1 = latent
    return latent, enc1


if __name__ == "__main__":
    # Small shapes consistent with the module.
    N, C_in, H, W = 2, 4, 16, 16
    hidden = 32                        # spatial_hidden_dim (divisible by 2)
    num_spatial_layers = 3
    strides = generate_restriction_strides(num_spatial_layers)   # [1, 2, 1]

    key = jax.random.PRNGKey(0)
    key, kx = jax.random.split(key)
    x = jax.random.normal(kx, (N, C_in, H, W), dtype=jnp.float32)

    layer_params = []
    cin = C_in
    for _ in range(num_spatial_layers):
        key, kw, kb = jax.random.split(key, 3)
        scale = 1.0 / float(cin * 9) ** 0.5
        layer_params.append(dict(
            weight=scale * jax.random.normal(kw, (hidden, cin, 3, 3), jnp.float32),
            bias=scale * jax.random.normal(kb, (hidden,), jnp.float32),
            gamma=jnp.ones((hidden,), jnp.float32),    # GroupNorm affine init
            beta=jnp.zeros((hidden,), jnp.float32)))
        cin = hidden

    # jit so the im2col producers can be fused into the pallas_call inputs.
    run = jax.jit(lambda xx, pp: multi_grid_encoder(xx, pp, strides))
    latent, enc1 = jax.block_until_ready(run(x, layer_params))

    ref_latent, ref_enc1 = jax.block_until_ready(
        _reference_encoder(x, layer_params, strides))

    assert enc1.shape == ref_enc1.shape == (N, hidden, H, W), (enc1.shape,)
    assert latent.shape == ref_latent.shape == (N, hidden, H // 2, W // 2), (latent.shape,)
    # Kernel uses bf16 MXU inputs and bf16 inter-layer activations with an f32
    # epilogue; reference is full f32.
    err1 = float(jnp.max(jnp.abs(enc1 - ref_enc1)))
    err2 = float(jnp.max(jnp.abs(latent - ref_latent)))
    assert jnp.allclose(enc1, ref_enc1, atol=5e-2, rtol=5e-2), err1
    assert jnp.allclose(latent, ref_latent, atol=5e-2, rtol=5e-2), err2
    print("KERNEL_OK")
</pallas_src>

<mosaic_0001>
module attributes {stable_mosaic.version = 11 : i64} {
  func.func @_restriction_kernel(%arg0: i32, %arg1: memref<48x256xbf16, #tpu.memory_space<vmem>>, %arg2: memref<32x48xbf16, #tpu.memory_space<vmem>>, %arg3: memref<32x3xf32, #tpu.memory_space<vmem>>, %arg4: memref<32x256xbf16, #tpu.memory_space<vmem>>) attributes {dimension_semantics = [#tpu.dimension_semantics<parallel>], iteration_bounds = array<i64: 2>, scalar_prefetch = 0 : i64, scratch_operands = 0 : i64, tpu.core_type = #tpu.core_type<tc>, window_params = [{transform_indices = @transform_0, window_bounds = array<i64: 48, 256>}, {pipeline_mode = #tpu.pipeline_mode<synchronous>, transform_indices = @transform_1, window_bounds = array<i64: 32, 48>}, {pipeline_mode = #tpu.pipeline_mode<synchronous>, transform_indices = @transform_2, window_bounds = array<i64: 32, 3>}, {transform_indices = @transform_3, window_bounds = array<i64: 32, 256>}]} {
    %c0 = arith.constant 0 : index
    %c0_0 = arith.constant 0 : index
    %0 = vector.load %arg2[%c0, %c0_0] : memref<32x48xbf16, #tpu.memory_space<vmem>>, vector<32x48xbf16>
    %c0_1 = arith.constant 0 : index
    %c0_2 = arith.constant 0 : index
    %1 = vector.load %arg1[%c0_1, %c0_2] : memref<48x256xbf16, #tpu.memory_space<vmem>>, vector<48x256xbf16>
    %cst = arith.constant dense<0.000000e+00> : vector<32x256xf32>
    %2 = tpu.matmul %0, %1, %cst {dimension_numbers = #tpu.dot_dimension_numbers<[1], [0], [0], [1], [0, 0, 1, 1], [], []>} : vector<32x48xbf16>, vector<48x256xbf16>, vector<32x256xf32> -> vector<32x256xf32>
    %c0_3 = arith.constant 0 : index
    %c0_4 = arith.constant 0 : index
    %3 = vector.load %arg3[%c0_3, %c0_4] : memref<32x3xf32, #tpu.memory_space<vmem>>, vector<32x1xf32>
    %4 = vector.broadcast %3 : vector<32x1xf32> to vector<32x256xf32>
    %5 = arith.addf %2, %4 : vector<32x256xf32>
    %6 = tpu.iota {dimensions = array<i32: 0>} : vector<32x256xi32>
    %7 = tpu.iota {dimensions = array<i32: 1>} : vector<32x256xi32>
    %c0_i32 = arith.constant 0 : i32
    %8 = vector.broadcast %c0_i32 : i32 to vector<32x256xi32>
    %9 = arith.cmpi sge, %6, %8 : vector<32x256xi32>
    %c16_i32 = arith.constant 16 : i32
    %10 = vector.broadcast %c16_i32 : i32 to vector<32x256xi32>
    %11 = arith.cmpi slt, %6, %10 : vector<32x256xi32>
    %12 = arith.andi %9, %11 : vector<32x256xi1>
    %c0_i32_5 = arith.constant 0 : i32
    %13 = vector.broadcast %c0_i32_5 : i32 to vector<32x256xi32>
    %14 = arith.cmpi sge, %7, %13 : vector<32x256xi32>
    %15 = arith.andi %12, %14 : vector<32x256xi1>
    %c256_i32 = arith.constant 256 : i32
    %16 = vector.broadcast %c256_i32 : i32 to vector<32x256xi32>
    %17 = arith.cmpi slt, %7, %16 : vector<32x256xi32>
    %18 = arith.andi %15, %17 : vector<32x256xi1>
    %cst_6 = arith.constant 0.000000e+00 : f32
    %19 = vector.broadcast %cst_6 : f32 to vector<32x256xf32>
    %20 = arith.select %18, %5, %19 : vector<32x256xi1>, vector<32x256xf32>
    %cst_7 = arith.constant dense<0.000000e+00> : vector<32xf32>
    %21 = vector.multi_reduction <add>, %20, %cst_7 [1] : vector<32x256xf32> to vector<32xf32>
    %22 = vector.shape_cast %21 : vector<32xf32> to vector<32x1xf32>
    %cst_8 = arith.constant dense<0.000000e+00> : vector<1xf32>
    %23 = vector.multi_reduction <add>, %22, %cst_8 [0] : vector<32x1xf32> to vector<1xf32>
    %24 = vector.shape_cast %23 : vector<1xf32> to vector<1x1xf32>
    %cst_9 = arith.constant 2.44140625E-4 : f32
    %25 = vector.broadcast %cst_9 : f32 to vector<1x1xf32>
    %26 = arith.mulf %24, %25 : vector<1x1xf32>
    %27 = vector.broadcast %26 : vector<1x1xf32> to vector<32x256xf32>
    %28 = arith.subf %5, %27 : vector<32x256xf32>
    %cst_10 = arith.constant 0.000000e+00 : f32
    %29 = vector.broadcast %cst_10 : f32 to vector<32x256xf32>
    %30 = arith.select %18, %28, %29 : vector<32x256xi1>, vector<32x256xf32>
    %31 = arith.mulf %30, %30 : vector<32x256xf32>
    %cst_11 = arith.constant dense<0.000000e+00> : vector<32xf32>
    %32 = vector.multi_reduction <add>, %31, %cst_11 [1] : vector<32x256xf32> to vector<32xf32>
    %33 = vector.shape_cast %32 : vector<32xf32> to vector<32x1xf32>
    %cst_12 = arith.constant dense<0.000000e+00> : vector<1xf32>
    %34 = vector.multi_reduction <add>, %33, %cst_12 [0] : vector<32x1xf32> to vector<1xf32>
    %35 = vector.shape_cast %34 : vector<1xf32> to vector<1x1xf32>
    %cst_13 = arith.constant 2.44140625E-4 : f32
    %36 = vector.broadcast %cst_13 : f32 to vector<1x1xf32>
    %37 = arith.mulf %35, %36 : vector<1x1xf32>
    %38 = vector.broadcast %26 : vector<1x1xf32> to vector<32x256xf32>
    %39 = arith.subf %5, %38 : vector<32x256xf32>
    %cst_14 = arith.constant 9.99999974E-6 : f32
    %40 = vector.broadcast %cst_14 : f32 to vector<1x1xf32>
    %41 = arith.addf %37, %40 : vector<1x1xf32>
    %42 = math.rsqrt %41 : vector<1x1xf32>
    %43 = vector.broadcast %42 : vector<1x1xf32> to vector<32x256xf32>
    %44 = arith.mulf %39, %43 : vector<32x256xf32>
    %45 = arith.select %18, %44, %5 : vector<32x256xi1>, vector<32x256xf32>
    %c16_i32_15 = arith.constant 16 : i32
    %46 = vector.broadcast %c16_i32_15 : i32 to vector<32x256xi32>
    %47 = arith.cmpi sge, %6, %46 : vector<32x256xi32>
    %c32_i32 = arith.constant 32 : i32
    %48 = vector.broadcast %c32_i32 : i32 to vector<32x256xi32>
    %49 = arith.cmpi slt, %6, %48 : vector<32x256xi32>
    %50 = arith.andi %47, %49 : vector<32x256xi1>
    %c0_i32_16 = arith.constant 0 : i32
    %51 = vector.broadcast %c0_i32_16 : i32 to vector<32x256xi32>
    %52 = arith.cmpi sge, %7, %51 : vector<32x256xi32>
    %53 = arith.andi %50, %52 : vector<32x256xi1>
    %c256_i32_17 = arith.constant 256 : i32
    %54 = vector.broadcast %c256_i32_17 : i32 to vector<32x256xi32>
    %55 = arith.cmpi slt, %7, %54 : vector<32x256xi32>
    %56 = arith.andi %53, %55 : vector<32x256xi1>
    %cst_18 = arith.constant 0.000000e+00 : f32
    %57 = vector.broadcast %cst_18 : f32 to vector<32x256xf32>
    %58 = arith.select %56, %5, %57 : vector<32x256xi1>, vector<32x256xf32>
    %cst_19 = arith.constant dense<0.000000e+00> : vector<32xf32>
    %59 = vector.multi_reduction <add>, %58, %cst_19 [1] : vector<32x256xf32> to vector<32xf32>
    %60 = vector.shape_cast %59 : vector<32xf32> to vector<32x1xf32>
    %cst_20 = arith.constant dense<0.000000e+00> : vector<1xf32>
    %61 = vector.multi_reduction <add>, %60, %cst_20 [0] : vector<32x1xf32> to vector<1xf32>
    %62 = vector.shape_cast %61 : vector<1xf32> to vector<1x1xf32>
    %cst_21 = arith.constant 2.44140625E-4 : f32
    %63 = vector.broadcast %cst_21 : f32 to vector<1x1xf32>
    %64 = arith.mulf %62, %63 : vector<1x1xf32>
    %65 = vector.broadcast %64 : vector<1x1xf32> to vector<32x256xf32>
    %66 = arith.subf %5, %65 : vector<32x256xf32>
    %cst_22 = arith.constant 0.000000e+00 : f32
    %67 = vector.broadcast %cst_22 : f32 to vector<32x256xf32>
    %68 = arith.select %56, %66, %67 : vector<32x256xi1>, vector<32x256xf32>
    %69 = arith.mulf %68, %68 : vector<32x256xf32>
    %cst_23 = arith.constant dense<0.000000e+00> : vector<32xf32>
    %70 = vector.multi_reduction <add>, %69, %cst_23 [1] : vector<32x256xf32> to vector<32xf32>
    %71 = vector.shape_cast %70 : vector<32xf32> to vector<32x1xf32>
    %cst_24 = arith.constant dense<0.000000e+00> : vector<1xf32>
    %72 = vector.multi_reduction <add>, %71, %cst_24 [0] : vector<32x1xf32> to vector<1xf32>
    %73 = vector.shape_cast %72 : vector<1xf32> to vector<1x1xf32>
    %cst_25 = arith.constant 2.44140625E-4 : f32
    %74 = vector.broadcast %cst_25 : f32 to vector<1x1xf32>
    %75 = arith.mulf %73, %74 : vector<1x1xf32>
    %76 = vector.broadcast %64 : vector<1x1xf32> to vector<32x256xf32>
    %77 = arith.subf %5, %76 : vector<32x256xf32>
    %cst_26 = arith.constant 9.99999974E-6 : f32
    %78 = vector.broadcast %cst_26 : f32 to vector<1x1xf32>
    %79 = arith.addf %75, %78 : vector<1x1xf32>
    %80 = math.rsqrt %79 : vector<1x1xf32>
    %81 = vector.broadcast %80 : vector<1x1xf32> to vector<32x256xf32>
    %82 = arith.mulf %77, %81 : vector<32x256xf32>
    %83 = arith.select %56, %82, %45 : vector<32x256xi1>, vector<32x256xf32>
    %c0_27 = arith.constant 0 : index
    %c1 = arith.constant 1 : index
    %84 = vector.load %arg3[%c0_27, %c1] : memref<32x3xf32, #tpu.memory_space<vmem>>, vector<32x1xf32>
    %85 = vector.broadcast %84 : vector<32x1xf32> to vector<32x256xf32>
    %86 = arith.mulf %83, %85 : vector<32x256xf32>
    %c0_28 = arith.constant 0 : index
    %c2 = arith.constant 2 : index
    %87 = vector.load %arg3[%c0_28, %c2] : memref<32x3xf32, #tpu.memory_space<vmem>>, vector<32x1xf32>
    %88 = vector.broadcast %87 : vector<32x1xf32> to vector<32x256xf32>
    %89 = arith.addf %86, %88 : vector<32x256xf32>
    %cst_29 = arith.constant 0.000000e+00 : f32
    %90 = vector.broadcast %cst_29 : f32 to vector<32x256xf32>
    %91 = arith.cmpf ogt, %89, %90 : vector<32x256xf32>
    %cst_30 = arith.constant 2.000000e-01 : f32
    %92 = vector.broadcast %cst_30 : f32 to vector<32x256xf32>
    %93 = arith.mulf %92, %89 : vector<32x256xf32>
    %94 = arith.select %91, %89, %93 : vector<32x256xi1>, vector<32x256xf32>
    %95 = arith.truncf %94 : vector<32x256xf32> to vector<32x256xbf16>
    %c0_31 = arith.constant 0 : index
    %c0_32 = arith.constant 0 : index
    %96 = vector.load %arg4[%c0_31, %c0_32] : memref<32x256xbf16, #tpu.memory_space<vmem>>, vector<32x256xbf16>
    tpu.vector_store %arg4[%c0_31, %c0_32], %95 {strides = array<i32>} : memref<32x256xbf16, #tpu.memory_space<vmem>>, vector<32x256xbf16>,
    return
  }
  func.func @transform_0(%arg0: i32) -> (i32, i32) {
    %c0_i32 = arith.constant 0 : i32
    %c0_i32_0 = arith.constant 0 : i32
    return %c0_i32, %arg0 : i32, i32
  }
  func.func @transform_1(%arg0: i32) -> (i32, i32) {
    %c0_i32 = arith.constant 0 : i32
    %c0_i32_0 = arith.constant 0 : i32
    %c0_i32_1 = arith.constant 0 : i32
    return %c0_i32, %c0_i32_0 : i32, i32
  }
  func.func @transform_2(%arg0: i32) -> (i32, i32) {
    %c0_i32 = arith.constant 0 : i32
    %c0_i32_0 = arith.constant 0 : i32
    %c0_i32_1 = arith.constant 0 : i32
    return %c0_i32, %c0_i32_0 : i32, i32
  }
  func.func @transform_3(%arg0: i32) -> (i32, i32) {
    %c0_i32 = arith.constant 0 : i32
    %c0_i32_0 = arith.constant 0 : i32
    return %c0_i32, %arg0 : i32, i32
  }
}

module attributes {stable_mosaic.version = 11 : i64} {
  func.func @_restriction_kernel(%arg0: i32, %arg1: memref<288x128xbf16, #tpu.memory_space<vmem>>, %arg2: memref<32x288xbf16, #tpu.memory_space<vmem>>, %arg3: memref<32x3xf32, #tpu.memory_space<vmem>>, %arg4: memref<32x128xbf16, #tpu.memory_space<vmem>>) attributes {dimension_semantics = [#tpu.dimension_semantics<parallel>], iteration_bounds = array<i64: 1>, scalar_prefetch = 0 : i64, scratch_operands = 0 : i64, tpu.core_type = #tpu.core_type<tc>, window_params = [{transform_indices = @transform_0, window_bounds = array<i64: 288, 128>}, {pipeline_mode = #tpu.pipeline_mode<synchronous>, transform_indices = @transform_1, window_bounds = array<i64: 32, 288>}, {pipeline_mode = #tpu.pipeline_mode<synchronous>, transform_indices = @transform_2, window_bounds = array<i64: 32, 3>}, {transform_indices = @transform_3, window_bounds = array<i64: 32, 128>}]} {
    %c0 = arith.constant 0 : index
    %c0_0 = arith.constant 0 : index
    %0 = vector.load %arg2[%c0, %c0_0] : memref<32x288xbf16, #tpu.memory_space<vmem>>, vector<32x288xbf16>
    %c0_1 = arith.constant 0 : index
    %c0_2 = arith.constant 0 : index
    %1 = vector.load %arg1[%c0_1, %c0_2] : memref<288x128xbf16, #tpu.memory_space<vmem>>, vector<288x128xbf16>
    %cst = arith.constant dense<0.000000e+00> : vector<32x128xf32>
    %2 = tpu.matmul %0, %1, %cst {dimension_numbers = #tpu.dot_dimension_numbers<[1], [0], [0], [1], [0, 0, 1, 1], [], []>} : vector<32x288xbf16>, vector<288x128xbf16>, vector<32x128xf32> -> vector<32x128xf32>
    %c0_3 = arith.constant 0 : index
    %c0_4 = arith.constant 0 : index
    %3 = vector.load %arg3[%c0_3, %c0_4] : memref<32x3xf32, #tpu.memory_space<vmem>>, vector<32x1xf32>
    %4 = vector.broadcast %3 : vector<32x1xf32> to vector<32x128xf32>
    %5 = arith.addf %2, %4 : vector<32x128xf32>
    %6 = tpu.iota {dimensions = array<i32: 0>} : vector<32x128xi32>
    %7 = tpu.iota {dimensions = array<i32: 1>} : vector<32x128xi32>
    %c0_i32 = arith.constant 0 : i32
    %8 = vector.broadcast %c0_i32 : i32 to vector<32x128xi32>
    %9 = arith.cmpi sge, %6, %8 : vector<32x128xi32>
    %c16_i32 = arith.constant 16 : i32
    %10 = vector.broadcast %c16_i32 : i32 to vector<32x128xi32>
    %11 = arith.cmpi slt, %6, %10 : vector<32x128xi32>
    %12 = arith.andi %9, %11 : vector<32x128xi1>
    %c0_i32_5 = arith.constant 0 : i32
    %13 = vector.broadcast %c0_i32_5 : i32 to vector<32x128xi32>
    %14 = arith.cmpi sge, %7, %13 : vector<32x128xi32>
    %15 = arith.andi %12, %14 : vector<32x128xi1>
    %c64_i32 = arith.constant 64 : i32
    %16 = vector.broadcast %c64_i32 : i32 to vector<32x128xi32>
    %17 = arith.cmpi slt, %7, %16 : vector<32x128xi32>
    %18 = arith.andi %15, %17 : vector<32x128xi1>
    %cst_6 = arith.constant 0.000000e+00 : f32
    %19 = vector.broadcast %cst_6 : f32 to vector<32x128xf32>
    %20 = arith.select %18, %5, %19 : vector<32x128xi1>, vector<32x128xf32>
    %cst_7 = arith.constant dense<0.000000e+00> : vector<32xf32>
    %21 = vector.multi_reduction <add>, %20, %cst_7 [1] : vector<32x128xf32> to vector<32xf32>
    %22 = vector.shape_cast %21 : vector<32xf32> to vector<32x1xf32>
    %cst_8 = arith.constant dense<0.000000e+00> : vector<1xf32>
    %23 = vector.multi_reduction <add>, %22, %cst_8 [0] : vector<32x1xf32> to vector<1xf32>
    %24 = vector.shape_cast %23 : vector<1xf32> to vector<1x1xf32>
    %cst_9 = arith.constant 9.765625E-4 : f32
    %25 = vector.broadcast %cst_9 : f32 to vector<1x1xf32>
    %26 = arith.mulf %24, %25 : vector<1x1xf32>
    %27 = vector.broadcast %26 : vector<1x1xf32> to vector<32x128xf32>
    %28 = arith.subf %5, %27 : vector<32x128xf32>
    %cst_10 = arith.constant 0.000000e+00 : f32
    %29 = vector.broadcast %cst_10 : f32 to vector<32x128xf32>
    %30 = arith.select %18, %28, %29 : vector<32x128xi1>, vector<32x128xf32>
    %31 = arith.mulf %30, %30 : vector<32x128xf32>
    %cst_11 = arith.constant dense<0.000000e+00> : vector<32xf32>
    %32 = vector.multi_reduction <add>, %31, %cst_11 [1] : vector<32x128xf32> to vector<32xf32>
    %33 = vector.shape_cast %32 : vector<32xf32> to vector<32x1xf32>
    %cst_12 = arith.constant dense<0.000000e+00> : vector<1xf32>
    %34 = vector.multi_reduction <add>, %33, %cst_12 [0] : vector<32x1xf32> to vector<1xf32>
    %35 = vector.shape_cast %34 : vector<1xf32> to vector<1x1xf32>
    %cst_13 = arith.constant 9.765625E-4 : f32
    %36 = vector.broadcast %cst_13 : f32 to vector<1x1xf32>
    %37 = arith.mulf %35, %36 : vector<1x1xf32>
    %38 = vector.broadcast %26 : vector<1x1xf32> to vector<32x128xf32>
    %39 = arith.subf %5, %38 : vector<32x128xf32>
    %cst_14 = arith.constant 9.99999974E-6 : f32
    %40 = vector.broadcast %cst_14 : f32 to vector<1x1xf32>
    %41 = arith.addf %37, %40 : vector<1x1xf32>
    %42 = math.rsqrt %41 : vector<1x1xf32>
    %43 = vector.broadcast %42 : vector<1x1xf32> to vector<32x128xf32>
    %44 = arith.mulf %39, %43 : vector<32x128xf32>
    %45 = arith.select %18, %44, %5 : vector<32x128xi1>, vector<32x128xf32>
    %c64_i32_15 = arith.constant 64 : i32
    %46 = vector.broadcast %c64_i32_15 : i32 to vector<32x128xi32>
    %47 = arith.cmpi sge, %7, %46 : vector<32x128xi32>
    %48 = arith.andi %12, %47 : vector<32x128xi1>
    %c128_i32 = arith.constant 128 : i32
    %49 = vector.broadcast %c128_i32 : i32 to vector<32x128xi32>
    %50 = arith.cmpi slt, %7, %49 : vector<32x128xi32>
    %51 = arith.andi %48, %50 : vector<32x128xi1>
    %cst_16 = arith.constant 0.000000e+00 : f32
    %52 = vector.broadcast %cst_16 : f32 to vector<32x128xf32>
    %53 = arith.select %51, %5, %52 : vector<32x128xi1>, vector<32x128xf32>
    %cst_17 = arith.constant dense<0.000000e+00> : vector<32xf32>
    %54 = vector.multi_reduction <add>, %53, %cst_17 [1] : vector<32x128xf32> to vector<32xf32>
    %55 = vector.shape_cast %54 : vector<32xf32> to vector<32x1xf32>
    %cst_18 = arith.constant dense<0.000000e+00> : vector<1xf32>
    %56 = vector.multi_reduction <add>, %55, %cst_18 [0] : vector<32x1xf32> to vector<1xf32>
    %57 = vector.shape_cast %56 : vector<1xf32> to vector<1x1xf32>
    %cst_19 = arith.constant 9.765625E-4 : f32
    %58 = vector.broadcast %cst_19 : f32 to vector<1x1xf32>
    %59 = arith.mulf %57, %58 : vector<1x1xf32>
    %60 = vector.broadcast %59 : vector<1x1xf32> to vector<32x128xf32>
    %61 = arith.subf %5, %60 : vector<32x128xf32>
    %cst_20 = arith.constant 0.000000e+00 : f32
    %62 = vector.broadcast %cst_20 : f32 to vector<32x128xf32>
    %63 = arith.select %51, %61, %62 : vector<32x128xi1>, vector<32x128xf32>
    %64 = arith.mulf %63, %63 : vector<32x128xf32>
    %cst_21 = arith.constant dense<0.000000e+00> : vector<32xf32>
    %65 = vector.multi_reduction <add>, %64, %cst_21 [1] : vector<32x128xf32> to vector<32xf32>
    %66 = vector.shape_cast %65 : vector<32xf32> to vector<32x1xf32>
    %cst_22 = arith.constant dense<0.000000e+00> : vector<1xf32>
    %67 = vector.multi_reduction <add>, %66, %cst_22 [0] : vector<32x1xf32> to vector<1xf32>
    %68 = vector.shape_cast %67 : vector<1xf32> to vector<1x1xf32>
    %cst_23 = arith.constant 9.765625E-4 : f32
    %69 = vector.broadcast %cst_23 : f32 to vector<1x1xf32>
    %70 = arith.mulf %68, %69 : vector<1x1xf32>
    %71 = vector.broadcast %59 : vector<1x1xf32> to vector<32x128xf32>
    %72 = arith.subf %5, %71 : vector<32x128xf32>
    %cst_24 = arith.constant 9.99999974E-6 : f32
    %73 = vector.broadcast %cst_24 : f32 to vector<1x1xf32>
    %74 = arith.addf %70, %73 : vector<1x1xf32>
    %75 = math.rsqrt %74 : vector<1x1xf32>
    %76 = vector.broadcast %75 : vector<1x1xf32> to vector<32x128xf32>
    %77 = arith.mulf %72, %76 : vector<32x128xf32>
    %78 = arith.select %51, %77, %45 : vector<32x128xi1>, vector<32x128xf32>
    %c16_i32_25 = arith.constant 16 : i32
    %79 = vector.broadcast %c16_i32_25 : i32 to vector<32x128xi32>
    %80 = arith.cmpi sge, %6, %79 : vector<32x128xi32>
    %c32_i32 = arith.constant 32 : i32
    %81 = vector.broadcast %c32_i32 : i32 to vector<32x128xi32>
    %82 = arith.cmpi slt, %6, %81 : vector<32x128xi32>
    %83 = arith.andi %80, %82 : vector<32x128xi1>
    %c0_i32_26 = arith.constant 0 : i32
    %84 = vector.broadcast %c0_i32_26 : i32 to vector<32x128xi32>
    %85 = arith.cmpi sge, %7, %84 : vector<32x128xi32>
    %86 = arith.andi %83, %85 : vector<32x128xi1>
    %c64_i32_27 = arith.constant 64 : i32
    %87 = vector.broadcast %c64_i32_27 : i32 to vector<32x128xi32>
    %88 = arith.cmpi slt, %7, %87 : vector<32x128xi32>
    %89 = arith.andi %86, %88 : vector<32x128xi1>
    %cst_28 = arith.constant 0.000000e+00 : f32
    %90 = vector.broadcast %cst_28 : f32 to vector<32x128xf32>
    %91 = arith.select %89, %5, %90 : vector<32x128xi1>, vector<32x128xf32>
    %cst_29 = arith.constant dense<0.000000e+00> : vector<32xf32>
    %92 = vector.multi_reduction <add>, %91, %cst_29 [1] : vector<32x128xf32> to vector<32xf32>
    %93 = vector.shape_cast %92 : vector<32xf32> to vector<32x1xf32>
    %cst_30 = arith.constant dense<0.000000e+00> : vector<1xf32>
    %94 = vector.multi_reduction <add>, %93, %cst_30 [0] : vector<32x1xf32> to vector<1xf32>
    %95 = vector.shape_cast %94 : vector<1xf32> to vector<1x1xf32>
    %cst_31 = arith.constant 9.765625E-4 : f32
    %96 = vector.broadcast %cst_31 : f32 to vector<1x1xf32>
    %97 = arith.mulf %95, %96 : vector<1x1xf32>
    %98 = vector.broadcast %97 : vector<1x1xf32> to vector<32x128xf32>
    %99 = arith.subf %5, %98 : vector<32x128xf32>
    %cst_32 = arith.constant 0.000000e+00 : f32
    %100 = vector.broadcast %cst_32 : f32 to vector<32x128xf32>
    %101 = arith.select %89, %99, %100 : vector<32x128xi1>, vector<32x128xf32>
    %102 = arith.mulf %101, %101 : vector<32x128xf32>
    %cst_33 = arith.constant dense<0.000000e+00> : vector<32xf32>
    %103 = vector.multi_reduction <add>, %102, %cst_33 [1] : vector<32x128xf32> to vector<32xf32>
    %104 = vector.shape_cast %103 : vector<32xf32> to vector<32x1xf32>
    %cst_34 = arith.constant dense<0.000000e+00> : vector<1xf32>
    %105 = vector.multi_reduction <add>, %104, %cst_34 [0] : vector<32x1xf32> to vector<1xf32>
    %106 = vector.shape_cast %105 : vector<1xf32> to vector<1x1xf32>
    %cst_35 = arith.constant 9.765625E-4 : f32
    %107 = vector.broadcast %cst_35 : f32 to vector<1x1xf32>
    %108 = arith.mulf %106, %107 : vector<1x1xf32>
    %109 = vector.broadcast %97 : vector<1x1xf32> to vector<32x128xf32>
    %110 = arith.subf %5, %109 : vector<32x128xf32>
    %cst_36 = arith.constant 9.99999974E-6 : f32
    %111 = vector.broadcast %cst_36 : f32 to vector<1x1xf32>
    %112 = arith.addf %108, %111 : vector<1x1xf32>
    %113 = math.rsqrt %112 : vector<1x1xf32>
    %114 = vector.broadcast %113 : vector<1x1xf32> to vector<32x128xf32>
    %115 = arith.mulf %110, %114 : vector<32x128xf32>
    %116 = arith.select %89, %115, %78 : vector<32x128xi1>, vector<32x128xf32>
    %c64_i32_37 = arith.constant 64 : i32
    %117 = vector.broadcast %c64_i32_37 : i32 to vector<32x128xi32>
    %118 = arith.cmpi sge, %7, %117 : vector<32x128xi32>
    %119 = arith.andi %83, %118 : vector<32x128xi1>
    %c128_i32_38 = arith.constant 128 : i32
    %120 = vector.broadcast %c128_i32_38 : i32 to vector<32x128xi32>
    %121 = arith.cmpi slt, %7, %120 : vector<32x128xi32>
    %122 = arith.andi %119, %121 : vector<32x128xi1>
    %cst_39 = arith.constant 0.000000e+00 : f32
    %123 = vector.broadcast %cst_39 : f32 to vector<32x128xf32>
    %124 = arith.select %122, %5, %123 : vector<32x128xi1>, vector<32x128xf32>
    %cst_40 = arith.constant dense<0.000000e+00> : vector<32xf32>
    %125 = vector.multi_reduction <add>, %124, %cst_40 [1] : vector<32x128xf32> to vector<32xf32>
    %126 = vector.shape_cast %125 : vector<32xf32> to vector<32x1xf32>
    %cst_41 = arith.constant dense<0.000000e+00> : vector<1xf32>
    %127 = vector.multi_reduction <add>, %126, %cst_41 [0] : vector<32x1xf32> to vector<1xf32>
    %128 = vector.shape_cast %127 : vector<1xf32> to vector<1x1xf32>
    %cst_42 = arith.constant 9.765625E-4 : f32
    %129 = vector.broadcast %cst_42 : f32 to vector<1x1xf32>
    %130 = arith.mulf %128, %129 : vector<1x1xf32>
    %131 = vector.broadcast %130 : vector<1x1xf32> to vector<32x128xf32>
    %132 = arith.subf %5, %131 : vector<32x128xf32>
    %cst_43 = arith.constant 0.000000e+00 : f32
    %133 = vector.broadcast %cst_43 : f32 to vector<32x128xf32>
    %134 = arith.select %122, %132, %133 : vector<32x128xi1>, vector<32x128xf32>
    %135 = arith.mulf %134, %134 : vector<32x128xf32>
    %cst_44 = arith.constant dense<0.000000e+00> : vector<32xf32>
    %136 = vector.multi_reduction <add>, %135, %cst_44 [1] : vector<32x128xf32> to vector<32xf32>
    %137 = vector.shape_cast %136 : vector<32xf32> to vector<32x1xf32>
    %cst_45 = arith.constant dense<0.000000e+00> : vector<1xf32>
    %138 = vector.multi_reduction <add>, %137, %cst_45 [0] : vector<32x1xf32> to vector<1xf32>
    %139 = vector.shape_cast %138 : vector<1xf32> to vector<1x1xf32>
    %cst_46 = arith.constant 9.765625E-4 : f32
    %140 = vector.broadcast %cst_46 : f32 to vector<1x1xf32>
    %141 = arith.mulf %139, %140 : vector<1x1xf32>
    %142 = vector.broadcast %130 : vector<1x1xf32> to vector<32x128xf32>
    %143 = arith.subf %5, %142 : vector<32x128xf32>
    %cst_47 = arith.constant 9.99999974E-6 : f32
    %144 = vector.broadcast %cst_47 : f32 to vector<1x1xf32>
    %145 = arith.addf %141, %144 : vector<1x1xf32>
    %146 = math.rsqrt %145 : vector<1x1xf32>
    %147 = vector.broadcast %146 : vector<1x1xf32> to vector<32x128xf32>
    %148 = arith.mulf %143, %147 : vector<32x128xf32>
    %149 = arith.select %122, %148, %116 : vector<32x128xi1>, vector<32x128xf32>
    %c0_48 = arith.constant 0 : index
    %c1 = arith.constant 1 : index
    %150 = vector.load %arg3[%c0_48, %c1] : memref<32x3xf32, #tpu.memory_space<vmem>>, vector<32x1xf32>
    %151 = vector.broadcast %150 : vector<32x1xf32> to vector<32x128xf32>
    %152 = arith.mulf %149, %151 : vector<32x128xf32>
    %c0_49 = arith.constant 0 : index
    %c2 = arith.constant 2 : index
    %153 = vector.load %arg3[%c0_49, %c2] : memref<32x3xf32, #tpu.memory_space<vmem>>, vector<32x1xf32>
    %154 = vector.broadcast %153 : vector<32x1xf32> to vector<32x128xf32>
    %155 = arith.addf %152, %154 : vector<32x128xf32>
    %cst_50 = arith.constant 0.000000e+00 : f32
    %156 = vector.broadcast %cst_50 : f32 to vector<32x128xf32>
    %157 = arith.cmpf ogt, %155, %156 : vector<32x128xf32>
    %cst_51 = arith.constant 2.000000e-01 : f32
    %158 = vector.broadcast %cst_51 : f32 to vector<32x128xf32>
    %159 = arith.mulf %158, %155 : vector<32x128xf32>
    %160 = arith.select %157, %155, %159 : vector<32x128xi1>, vector<32x128xf32>
    %161 = arith.truncf %160 : vector<32x128xf32> to vector<32x128xbf16>
    %c0_52 = arith.constant 0 : index
    %c0_53 = arith.constant 0 : index
    %162 = vector.load %arg4[%c0_52, %c0_53] : memref<32x128xbf16, #tpu.memory_space<vmem>>, vector<32x128xbf16>
    tpu.vector_store %arg4[%c0_52, %c0_53], %161 {strides = array<i32>} : memref<32x128xbf16, #tpu.memory_space<vmem>>, vector<32x128xbf16>,
    return
  }
  func.func @transform_0(%arg0: i32) -> (i32, i32) {
    %c0_i32 = arith.constant 0 : i32
    %c0_i32_0 = arith.constant 0 : i32
    return %c0_i32, %arg0 : i32, i32
  }
  func.func @transform_1(%arg0: i32) -> (i32, i32) {
    %c0_i32 = arith.constant 0 : i32
    %c0_i32_0 = arith.constant 0 : i32
    %c0_i32_1 = arith.constant 0 : i32
    return %c0_i32, %c0_i32_0 : i32, i32
  }
  func.func @transform_2(%arg0: i32) -> (i32, i32) {
    %c0_i32 = arith.constant 0 : i32
    %c0_i32_0 = arith.constant 0 : i32
    %c0_i32_1 = arith.constant 0 : i32
    return %c0_i32, %c0_i32_0 : i32, i32
  }
  func.func @transform_3(%arg0: i32) -> (i32, i32) {
    %c0_i32 = arith.constant 0 : i32
    %c0_i32_0 = arith.constant 0 : i32
    return %c0_i32, %arg0 : i32, i32
  }
}

module attributes {stable_mosaic.version = 11 : i64} {
  func.func @_restriction_kernel(%arg0: i32, %arg1: memref<288x128xbf16, #tpu.memory_space<vmem>>, %arg2: memref<32x288xbf16, #tpu.memory_space<vmem>>, %arg3: memref<32x3xf32, #tpu.memory_space<vmem>>, %arg4: memref<32x128xf32, #tpu.memory_space<vmem>>) attributes {dimension_semantics = [#tpu.dimension_semantics<parallel>], iteration_bounds = array<i64: 1>, scalar_prefetch = 0 : i64, scratch_operands = 0 : i64, tpu.core_type = #tpu.core_type<tc>, window_params = [{transform_indices = @transform_0, window_bounds = array<i64: 288, 128>}, {pipeline_mode = #tpu.pipeline_mode<synchronous>, transform_indices = @transform_1, window_bounds = array<i64: 32, 288>}, {pipeline_mode = #tpu.pipeline_mode<synchronous>, transform_indices = @transform_2, window_bounds = array<i64: 32, 3>}, {transform_indices = @transform_3, window_bounds = array<i64: 32, 128>}]} {
    %c0 = arith.constant 0 : index
    %c0_0 = arith.constant 0 : index
    %0 = vector.load %arg2[%c0, %c0_0] : memref<32x288xbf16, #tpu.memory_space<vmem>>, vector<32x288xbf16>
    %c0_1 = arith.constant 0 : index
    %c0_2 = arith.constant 0 : index
    %1 = vector.load %arg1[%c0_1, %c0_2] : memref<288x128xbf16, #tpu.memory_space<vmem>>, vector<288x128xbf16>
    %cst = arith.constant dense<0.000000e+00> : vector<32x128xf32>
    %2 = tpu.matmul %0, %1, %cst {dimension_numbers = #tpu.dot_dimension_numbers<[1], [0], [0], [1], [0, 0, 1, 1], [], []>} : vector<32x288xbf16>, vector<288x128xbf16>, vector<32x128xf32> -> vector<32x128xf32>
    %c0_3 = arith.constant 0 : index
    %c0_4 = arith.constant 0 : index
    %3 = vector.load %arg3[%c0_3, %c0_4] : memref<32x3xf32, #tpu.memory_space<vmem>>, vector<32x1xf32>
    %4 = vector.broadcast %3 : vector<32x1xf32> to vector<32x128xf32>
    %5 = arith.addf %2, %4 : vector<32x128xf32>
    %6 = tpu.iota {dimensions = array<i32: 0>} : vector<32x128xi32>
    %7 = tpu.iota {dimensions = array<i32: 1>} : vector<32x128xi32>
    %c0_i32 = arith.constant 0 : i32
    %8 = vector.broadcast %c0_i32 : i32 to vector<32x128xi32>
    %9 = arith.cmpi sge, %6, %8 : vector<32x128xi32>
    %c16_i32 = arith.constant 16 : i32
    %10 = vector.broadcast %c16_i32 : i32 to vector<32x128xi32>
    %11 = arith.cmpi slt, %6, %10 : vector<32x128xi32>
    %12 = arith.andi %9, %11 : vector<32x128xi1>
    %c0_i32_5 = arith.constant 0 : i32
    %13 = vector.broadcast %c0_i32_5 : i32 to vector<32x128xi32>
    %14 = arith.cmpi sge, %7, %13 : vector<32x128xi32>
    %15 = arith.andi %12, %14 : vector<32x128xi1>
    %c64_i32 = arith.constant 64 : i32
    %16 = vector.broadcast %c64_i32 : i32 to vector<32x128xi32>
    %17 = arith.cmpi slt, %7, %16 : vector<32x128xi32>
    %18 = arith.andi %15, %17 : vector<32x128xi1>
    %cst_6 = arith.constant 0.000000e+00 : f32
    %19 = vector.broadcast %cst_6 : f32 to vector<32x128xf32>
    %20 = arith.select %18, %5, %19 : vector<32x128xi1>, vector<32x128xf32>
    %cst_7 = arith.constant dense<0.000000e+00> : vector<32xf32>
    %21 = vector.multi_reduction <add>, %20, %cst_7 [1] : vector<32x128xf32> to vector<32xf32>
    %22 = vector.shape_cast %21 : vector<32xf32> to vector<32x1xf32>
    %cst_8 = arith.constant dense<0.000000e+00> : vector<1xf32>
    %23 = vector.multi_reduction <add>, %22, %cst_8 [0] : vector<32x1xf32> to vector<1xf32>
    %24 = vector.shape_cast %23 : vector<1xf32> to vector<1x1xf32>
    %cst_9 = arith.constant 9.765625E-4 : f32
    %25 = vector.broadcast %cst_9 : f32 to vector<1x1xf32>
    %26 = arith.mulf %24, %25 : vector<1x1xf32>
    %27 = vector.broadcast %26 : vector<1x1xf32> to vector<32x128xf32>
    %28 = arith.subf %5, %27 : vector<32x128xf32>
    %cst_10 = arith.constant 0.000000e+00 : f32
    %29 = vector.broadcast %cst_10 : f32 to vector<32x128xf32>
    %30 = arith.select %18, %28, %29 : vector<32x128xi1>, vector<32x128xf32>
    %31 = arith.mulf %30, %30 : vector<32x128xf32>
    %cst_11 = arith.constant dense<0.000000e+00> : vector<32xf32>
    %32 = vector.multi_reduction <add>, %31, %cst_11 [1] : vector<32x128xf32> to vector<32xf32>
    %33 = vector.shape_cast %32 : vector<32xf32> to vector<32x1xf32>
    %cst_12 = arith.constant dense<0.000000e+00> : vector<1xf32>
    %34 = vector.multi_reduction <add>, %33, %cst_12 [0] : vector<32x1xf32> to vector<1xf32>
    %35 = vector.shape_cast %34 : vector<1xf32> to vector<1x1xf32>
    %cst_13 = arith.constant 9.765625E-4 : f32
    %36 = vector.broadcast %cst_13 : f32 to vector<1x1xf32>
    %37 = arith.mulf %35, %36 : vector<1x1xf32>
    %38 = vector.broadcast %26 : vector<1x1xf32> to vector<32x128xf32>
    %39 = arith.subf %5, %38 : vector<32x128xf32>
    %cst_14 = arith.constant 9.99999974E-6 : f32
    %40 = vector.broadcast %cst_14 : f32 to vector<1x1xf32>
    %41 = arith.addf %37, %40 : vector<1x1xf32>
    %42 = math.rsqrt %41 : vector<1x1xf32>
    %43 = vector.broadcast %42 : vector<1x1xf32> to vector<32x128xf32>
    %44 = arith.mulf %39, %43 : vector<32x128xf32>
    %45 = arith.select %18, %44, %5 : vector<32x128xi1>, vector<32x128xf32>
    %c64_i32_15 = arith.constant 64 : i32
    %46 = vector.broadcast %c64_i32_15 : i32 to vector<32x128xi32>
    %47 = arith.cmpi sge, %7, %46 : vector<32x128xi32>
    %48 = arith.andi %12, %47 : vector<32x128xi1>
    %c128_i32 = arith.constant 128 : i32
    %49 = vector.broadcast %c128_i32 : i32 to vector<32x128xi32>
    %50 = arith.cmpi slt, %7, %49 : vector<32x128xi32>
    %51 = arith.andi %48, %50 : vector<32x128xi1>
    %cst_16 = arith.constant 0.000000e+00 : f32
    %52 = vector.broadcast %cst_16 : f32 to vector<32x128xf32>
    %53 = arith.select %51, %5, %52 : vector<32x128xi1>, vector<32x128xf32>
    %cst_17 = arith.constant dense<0.000000e+00> : vector<32xf32>
    %54 = vector.multi_reduction <add>, %53, %cst_17 [1] : vector<32x128xf32> to vector<32xf32>
    %55 = vector.shape_cast %54 : vector<32xf32> to vector<32x1xf32>
    %cst_18 = arith.constant dense<0.000000e+00> : vector<1xf32>
    %56 = vector.multi_reduction <add>, %55, %cst_18 [0] : vector<32x1xf32> to vector<1xf32>
    %57 = vector.shape_cast %56 : vector<1xf32> to vector<1x1xf32>
    %cst_19 = arith.constant 9.765625E-4 : f32
    %58 = vector.broadcast %cst_19 : f32 to vector<1x1xf32>
    %59 = arith.mulf %57, %58 : vector<1x1xf32>
    %60 = vector.broadcast %59 : vector<1x1xf32> to vector<32x128xf32>
    %61 = arith.subf %5, %60 : vector<32x128xf32>
    %cst_20 = arith.constant 0.000000e+00 : f32
    %62 = vector.broadcast %cst_20 : f32 to vector<32x128xf32>
    %63 = arith.select %51, %61, %62 : vector<32x128xi1>, vector<32x128xf32>
    %64 = arith.mulf %63, %63 : vector<32x128xf32>
    %cst_21 = arith.constant dense<0.000000e+00> : vector<32xf32>
    %65 = vector.multi_reduction <add>, %64, %cst_21 [1] : vector<32x128xf32> to vector<32xf32>
    %66 = vector.shape_cast %65 : vector<32xf32> to vector<32x1xf32>
    %cst_22 = arith.constant dense<0.000000e+00> : vector<1xf32>
    %67 = vector.multi_reduction <add>, %66, %cst_22 [0] : vector<32x1xf32> to vector<1xf32>
    %68 = vector.shape_cast %67 : vector<1xf32> to vector<1x1xf32>
    %cst_23 = arith.constant 9.765625E-4 : f32
    %69 = vector.broadcast %cst_23 : f32 to vector<1x1xf32>
    %70 = arith.mulf %68, %69 : vector<1x1xf32>
    %71 = vector.broadcast %59 : vector<1x1xf32> to vector<32x128xf32>
    %72 = arith.subf %5, %71 : vector<32x128xf32>
    %cst_24 = arith.constant 9.99999974E-6 : f32
    %73 = vector.broadcast %cst_24 : f32 to vector<1x1xf32>
    %74 = arith.addf %70, %73 : vector<1x1xf32>
    %75 = math.rsqrt %74 : vector<1x1xf32>
    %76 = vector.broadcast %75 : vector<1x1xf32> to vector<32x128xf32>
    %77 = arith.mulf %72, %76 : vector<32x128xf32>
    %78 = arith.select %51, %77, %45 : vector<32x128xi1>, vector<32x128xf32>
    %c16_i32_25 = arith.constant 16 : i32
    %79 = vector.broadcast %c16_i32_25 : i32 to vector<32x128xi32>
    %80 = arith.cmpi sge, %6, %79 : vector<32x128xi32>
    %c32_i32 = arith.constant 32 : i32
    %81 = vector.broadcast %c32_i32 : i32 to vector<32x128xi32>
    %82 = arith.cmpi slt, %6, %81 : vector<32x128xi32>
    %83 = arith.andi %80, %82 : vector<32x128xi1>
    %c0_i32_26 = arith.constant 0 : i32
    %84 = vector.broadcast %c0_i32_26 : i32 to vector<32x128xi32>
    %85 = arith.cmpi sge, %7, %84 : vector<32x128xi32>
    %86 = arith.andi %83, %85 : vector<32x128xi1>
    %c64_i32_27 = arith.constant 64 : i32
    %87 = vector.broadcast %c64_i32_27 : i32 to vector<32x128xi32>
    %88 = arith.cmpi slt, %7, %87 : vector<32x128xi32>
    %89 = arith.andi %86, %88 : vector<32x128xi1>
    %cst_28 = arith.constant 0.000000e+00 : f32
    %90 = vector.broadcast %cst_28 : f32 to vector<32x128xf32>
    %91 = arith.select %89, %5, %90 : vector<32x128xi1>, vector<32x128xf32>
    %cst_29 = arith.constant dense<0.000000e+00> : vector<32xf32>
    %92 = vector.multi_reduction <add>, %91, %cst_29 [1] : vector<32x128xf32> to vector<32xf32>
    %93 = vector.shape_cast %92 : vector<32xf32> to vector<32x1xf32>
    %cst_30 = arith.constant dense<0.000000e+00> : vector<1xf32>
    %94 = vector.multi_reduction <add>, %93, %cst_30 [0] : vector<32x1xf32> to vector<1xf32>
    %95 = vector.shape_cast %94 : vector<1xf32> to vector<1x1xf32>
    %cst_31 = arith.constant 9.765625E-4 : f32
    %96 = vector.broadcast %cst_31 : f32 to vector<1x1xf32>
    %97 = arith.mulf %95, %96 : vector<1x1xf32>
    %98 = vector.broadcast %97 : vector<1x1xf32> to vector<32x128xf32>
    %99 = arith.subf %5, %98 : vector<32x128xf32>
    %cst_32 = arith.constant 0.000000e+00 : f32
    %100 = vector.broadcast %cst_32 : f32 to vector<32x128xf32>
    %101 = arith.select %89, %99, %100 : vector<32x128xi1>, vector<32x128xf32>
    %102 = arith.mulf %101, %101 : vector<32x128xf32>
    %cst_33 = arith.constant dense<0.000000e+00> : vector<32xf32>
    %103 = vector.multi_reduction <add>, %102, %cst_33 [1] : vector<32x128xf32> to vector<32xf32>
    %104 = vector.shape_cast %103 : vector<32xf32> to vector<32x1xf32>
    %cst_34 = arith.constant dense<0.000000e+00> : vector<1xf32>
    %105 = vector.multi_reduction <add>, %104, %cst_34 [0] : vector<32x1xf32> to vector<1xf32>
    %106 = vector.shape_cast %105 : vector<1xf32> to vector<1x1xf32>
    %cst_35 = arith.constant 9.765625E-4 : f32
    %107 = vector.broadcast %cst_35 : f32 to vector<1x1xf32>
    %108 = arith.mulf %106, %107 : vector<1x1xf32>
    %109 = vector.broadcast %97 : vector<1x1xf32> to vector<32x128xf32>
    %110 = arith.subf %5, %109 : vector<32x128xf32>
    %cst_36 = arith.constant 9.99999974E-6 : f32
    %111 = vector.broadcast %cst_36 : f32 to vector<1x1xf32>
    %112 = arith.addf %108, %111 : vector<1x1xf32>
    %113 = math.rsqrt %112 : vector<1x1xf32>
    %114 = vector.broadcast %113 : vector<1x1xf32> to vector<32x128xf32>
    %115 = arith.mulf %110, %114 : vector<32x128xf32>
    %116 = arith.select %89, %115, %78 : vector<32x128xi1>, vector<32x128xf32>
    %c64_i32_37 = arith.constant 64 : i32
    %117 = vector.broadcast %c64_i32_37 : i32 to vector<32x128xi32>
    %118 = arith.cmpi sge, %7, %117 : vector<32x128xi32>
    %119 = arith.andi %83, %118 : vector<32x128xi1>
    %c128_i32_38 = arith.constant 128 : i32
    %120 = vector.broadcast %c128_i32_38 : i32 to vector<32x128xi32>
    %121 = arith.cmpi slt, %7, %120 : vector<32x128xi32>
    %122 = arith.andi %119, %121 : vector<32x128xi1>
    %cst_39 = arith.constant 0.000000e+00 : f32
    %123 = vector.broadcast %cst_39 : f32 to vector<32x128xf32>
    %124 = arith.select %122, %5, %123 : vector<32x128xi1>, vector<32x128xf32>
    %cst_40 = arith.constant dense<0.000000e+00> : vector<32xf32>
    %125 = vector.multi_reduction <add>, %124, %cst_40 [1] : vector<32x128xf32> to vector<32xf32>
    %126 = vector.shape_cast %125 : vector<32xf32> to vector<32x1xf32>
    %cst_41 = arith.constant dense<0.000000e+00> : vector<1xf32>
    %127 = vector.multi_reduction <add>, %126, %cst_41 [0] : vector<32x1xf32> to vector<1xf32>
    %128 = vector.shape_cast %127 : vector<1xf32> to vector<1x1xf32>
    %cst_42 = arith.constant 9.765625E-4 : f32
    %129 = vector.broadcast %cst_42 : f32 to vector<1x1xf32>
    %130 = arith.mulf %128, %129 : vector<1x1xf32>
    %131 = vector.broadcast %130 : vector<1x1xf32> to vector<32x128xf32>
    %132 = arith.subf %5, %131 : vector<32x128xf32>
    %cst_43 = arith.constant 0.000000e+00 : f32
    %133 = vector.broadcast %cst_43 : f32 to vector<32x128xf32>
    %134 = arith.select %122, %132, %133 : vector<32x128xi1>, vector<32x128xf32>
    %135 = arith.mulf %134, %134 : vector<32x128xf32>
    %cst_44 = arith.constant dense<0.000000e+00> : vector<32xf32>
    %136 = vector.multi_reduction <add>, %135, %cst_44 [1] : vector<32x128xf32> to vector<32xf32>
    %137 = vector.shape_cast %136 : vector<32xf32> to vector<32x1xf32>
    %cst_45 = arith.constant dense<0.000000e+00> : vector<1xf32>
    %138 = vector.multi_reduction <add>, %137, %cst_45 [0] : vector<32x1xf32> to vector<1xf32>
    %139 = vector.shape_cast %138 : vector<1xf32> to vector<1x1xf32>
    %cst_46 = arith.constant 9.765625E-4 : f32
    %140 = vector.broadcast %cst_46 : f32 to vector<1x1xf32>
    %141 = arith.mulf %139, %140 : vector<1x1xf32>
    %142 = vector.broadcast %130 : vector<1x1xf32> to vector<32x128xf32>
    %143 = arith.subf %5, %142 : vector<32x128xf32>
    %cst_47 = arith.constant 9.99999974E-6 : f32
    %144 = vector.broadcast %cst_47 : f32 to vector<1x1xf32>
    %145 = arith.addf %141, %144 : vector<1x1xf32>
    %146 = math.rsqrt %145 : vector<1x1xf32>
    %147 = vector.broadcast %146 : vector<1x1xf32> to vector<32x128xf32>
    %148 = arith.mulf %143, %147 : vector<32x128xf32>
    %149 = arith.select %122, %148, %116 : vector<32x128xi1>, vector<32x128xf32>
    %c0_48 = arith.constant 0 : index
    %c1 = arith.constant 1 : index
    %150 = vector.load %arg3[%c0_48, %c1] : memref<32x3xf32, #tpu.memory_space<vmem>>, vector<32x1xf32>
    %151 = vector.broadcast %150 : vector<32x1xf32> to vector<32x128xf32>
    %152 = arith.mulf %149, %151 : vector<32x128xf32>
    %c0_49 = arith.constant 0 : index
    %c2 = arith.constant 2 : index
    %153 = vector.load %arg3[%c0_49, %c2] : memref<32x3xf32, #tpu.memory_space<vmem>>, vector<32x1xf32>
    %154 = vector.broadcast %153 : vector<32x1xf32> to vector<32x128xf32>
    %155 = arith.addf %152, %154 : vector<32x128xf32>
    %cst_50 = arith.constant 0.000000e+00 : f32
    %156 = vector.broadcast %cst_50 : f32 to vector<32x128xf32>
    %157 = arith.cmpf ogt, %155, %156 : vector<32x128xf32>
    %cst_51 = arith.constant 2.000000e-01 : f32
    %158 = vector.broadcast %cst_51 : f32 to vector<32x128xf32>
    %159 = arith.mulf %158, %155 : vector<32x128xf32>
    %160 = arith.select %157, %155, %159 : vector<32x128xi1>, vector<32x128xf32>
    %c0_52 = arith.constant 0 : index
    %c0_53 = arith.constant 0 : index
    %161 = vector.load %arg4[%c0_52, %c0_53] : memref<32x128xf32, #tpu.memory_space<vmem>>, vector<32x128xf32>
    tpu.vector_store %arg4[%c0_52, %c0_53], %160 {strides = array<i32>} : memref<32x128xf32, #tpu.memory_space<vmem>>, vector<32x128xf32>,
    return
  }
  func.func @transform_0(%arg0: i32) -> (i32, i32) {
    %c0_i32 = arith.constant 0 : i32
    %c0_i32_0 = arith.constant 0 : i32
    return %c0_i32, %arg0 : i32, i32
  }
  func.func @transform_1(%arg0: i32) -> (i32, i32) {
    %c0_i32 = arith.constant 0 : i32
    %c0_i32_0 = arith.constant 0 : i32
    %c0_i32_1 = arith.constant 0 : i32
    return %c0_i32, %c0_i32_0 : i32, i32
  }
  func.func @transform_2(%arg0: i32) -> (i32, i32) {
    %c0_i32 = arith.constant 0 : i32
    %c0_i32_0 = arith.constant 0 : i32
    %c0_i32_1 = arith.constant 0 : i32
    return %c0_i32, %c0_i32_0 : i32, i32
  }
  func.func @transform_3(%arg0: i32) -> (i32, i32) {
    %c0_i32 = arith.constant 0 : i32
    %c0_i32_0 = arith.constant 0 : i32
    return %c0_i32, %arg0 : i32, i32
  }
}

</mosaic_0001>

<llo_original>
// kernel: _lambda_.6
$region0: #{_lambda_.6}
  #allocation0 [shape = 'u32[]', space=smem, size = 0x4, offset = 0x4, fixed_abs, tag = 'smem constant byte address 0x4 - core index']
  #allocation1 [shape = 'u32[72,128]{1,0:T(1,128)}', space=vmem, size = 0x9000, scoped, tag = 'internal scratch']
  #allocation2 [shape = 'u32[2048]{0}', space=vmem, size = 0x2000, scoped, tag = 'scoped memory for _lambda_.6']
  #allocation3 [shape = 'u32[2048]{0}', space=vmem, size = 0x2000, scoped, tag = 'scoped memory for _lambda_.6']
  #allocation4 [shape = 'u32[2048]{0}', space=vmem, size = 0x2000, scoped, tag = 'scoped memory for _lambda_.6']
  #allocation5 [shape = 'u32[2048]{0}', space=vmem, size = 0x2000, scoped, tag = 'scoped memory for _lambda_.6']
  #allocation6 [shape = 'u32[2048]{0}', space=vmem, size = 0x2000, scoped, tag = 'scoped memory for _lambda_.6']
  %s0 = inlined_call_operand.vmem [shape: bf16[32,48], index: 0, kind: input, shape index: {}]
  %s1 = inlined_call_operand.vmem [shape: f32[32,3], index: 1, kind: input, shape index: {}]
  %s2 = inlined_call_operand.vmem [shape: bf16[36,512], index: 2, kind: input, shape index: {}]
  %s3 = inlined_call_operand.<no memory space> [shape: bf16[], index: 3, kind: input, shape index: {}]
  %s4 = inlined_call_operand.vmem [shape: bf16[32,512], index: 4, kind: output, shape index: {}]
  %s5 = sld [smem:[#allocation0]]
  $region79: #{_lambda_.6} parent=0
    _
  %s7 = ssub.s32 1, %s5
  %s8 = scalar_select 0, %s7, %s5
  %v9 = vstv %s3
  %v10 = vunpack.i.l.bf16 %v9
  %v12 = vunpack.i.h.bf16 %v9
  $region1: #{_lambda_.6} parent=0
    #allocation7 [shape = 'u8[32768]{0}', space=vmem, size = 0x8000, scoped, tag = 'output window, operand 0']
    loop: start=0, step=1, limit=4
    $region2: #{_lambda_.6} parent=1 // loop_pre_header
      _
    $region3: #{_lambda_.6} parent=1 // loop_header
      %s15 = sphi 0, %s19
      %p16 = scmp.ge.s32.totalorder %s15, 4
      %s25 = sphi 0, %s27
      %s28 = sphi 0, %s25
      %s29 = sphi 0, %s28
      %s45 = sphi 0, %s29
      %s49 = sphi 0, %s49
      %s51 = sphi 0, %s49
      %s52 = sphi 0, %s51
      %s66 = sphi 0, %s52
      %s70 = sphi 0, %s70
      %s72 = sphi 0, %s70
      %s73 = sphi 0, %s72
      %s87 = sphi 0, %s73
      %s93 = sphi 0, %s95
      %s96 = sphi 0, %s93
      %s97 = sphi 0, %s96
      %s113 = sphi 0, %s97
    $region4: #{_lambda_.6} parent=1 // loop_header_branch
      %18 = sbr.rel (%p16) target = $region8
    $region5: #{_lambda_.6} parent=1 // loop_body
      %s20 = ssub.s32 %s15, 1
      %s21 = ssub.s32 %s15, 2
      %s22 = sadd.s32 %s15, 1
      %s23 = ssub.s32 %s15, %s22
      %p24 = scmp.eq.s32.totalorder %s23, 0
      %s26 = sadd.s32 %s25, 1
      %s27 = scalar_select %p24, %s25, %s26
      %p30 = pneg %p24
      %p31 = scmp.eq.s32.totalorder %s15, 1
      %p32 = por %p30, %p31
      %p33 = scmp.ne.s32.totalorder %s25, %s28
      %p34 = scmp.eq.s32.totalorder %s15, 0
      %p35 = por %p33, %p34
      %p36 = scmp.ne.s32.totalorder %s25, %s28
      %p37 = scmp.eq.s32.totalorder %s20, 1
      %p38 = por %p36, %p37
      %p39 = scmp.ne.s32.totalorder %s28, %s29
      %p40 = scmp.eq.s32.totalorder %s20, 0
      %p41 = por %p39, %p40
      %p42 = scmp.ne.s32.totalorder %s28, %s29
      %p43 = scmp.eq.s32.totalorder %s21, 1
      %p44 = por %p42, %p43
      %p46 = scmp.ne.s32.totalorder %s29, %s45
      %p47 = scmp.eq.s32.totalorder %s21, 0
      %p48 = por %p46, %p47
      %s50 = sadd.s32 %s49, 1
      %p53 = scmp.eq.s32.totalorder %s15, 1
      %p54 = scmp.ne.s32.totalorder %s49, %s51
      %p55 = scmp.eq.s32.totalorder %s15, 0
      %p56 = por %p54, %p55
      %p57 = scmp.ne.s32.totalorder %s49, %s51
      %p58 = scmp.eq.s32.totalorder %s20, 1
      %p59 = por %p57, %p58
      %p60 = scmp.ne.s32.totalorder %s51, %s52
      %p61 = scmp.eq.s32.totalorder %s20, 0
      %p62 = por %p60, %p61
      %p63 = scmp.ne.s32.totalorder %s51, %s52
      %p64 = scmp.eq.s32.totalorder %s21, 1
      %p65 = por %p63, %p64
      %p67 = scmp.ne.s32.totalorder %s52, %s66
      %p68 = scmp.eq.s32.totalorder %s21, 0
      %p69 = por %p67, %p68
      %s71 = sadd.s32 %s70, 1
      %p74 = scmp.eq.s32.totalorder %s15, 1
      %p75 = scmp.ne.s32.totalorder %s70, %s72
      %p76 = scmp.eq.s32.totalorder %s15, 0
      %p77 = por %p75, %p76
      %p78 = scmp.ne.s32.totalorder %s70, %s72
      %p79 = scmp.eq.s32.totalorder %s20, 1
      %p80 = por %p78, %p79
      %p81 = scmp.ne.s32.totalorder %s72, %s73
      %p82 = scmp.eq.s32.totalorder %s20, 0
      %p83 = por %p81, %p82
      %p84 = scmp.ne.s32.totalorder %s72, %s73
      %p85 = scmp.eq.s32.totalorder %s21, 1
      %p86 = por %p84, %p85
      %p88 = scmp.ne.s32.totalorder %s73, %s87
      %p89 = scmp.eq.s32.totalorder %s21, 0
      %p90 = por %p88, %p89
      %s91 = ssub.s32 %s15, %s22
      %p92 = scmp.eq.s32.totalorder %s91, 0
      %s94 = sadd.s32 %s93, 1
      %s95 = scalar_select %p92, %s93, %s94
      %p98 = pneg %p92
      %p99 = scmp.eq.s32.totalorder %s15, 1
      %p100 = por %p98, %p99
      %p101 = scmp.ne.s32.totalorder %s93, %s96
      %p102 = scmp.eq.s32.totalorder %s15, 0
      %p103 = por %p101, %p102
      %p104 = scmp.ne.s32.totalorder %s93, %s96
      %p105 = scmp.eq.s32.totalorder %s20, 1
      %p106 = por %p104, %p105
      %p107 = scmp.ne.s32.totalorder %s96, %s97
      %p108 = scmp.eq.s32.totalorder %s20, 0
      %p109 = por %p107, %p108
      %p110 = scmp.ne.s32.totalorder %s96, %s97
      %p111 = scmp.eq.s32.totalorder %s21, 1
      %p112 = por %p110, %p111
      %p114 = scmp.ne.s32.totalorder %s97, %s113
      %p115 = scmp.eq.s32.totalorder %s21, 0
      %p116 = por %p114, %p115
      %p117 = scmp.le.s32.totalorder 1, %s15
      %p118 = scmp.lt.s32.totalorder %s15, 3
      %p119 = pnand %p117, %p118
      %p120 = pneg %p119
      // Predicated region
      $region9: #{_lambda_.6} parent=5 // pred_check
        _
      $region10: #{_lambda_.6} parent=5 // pred_check_branch
        %122 = sbr.rel (%p119) target = $region12
      $region11: #{_lambda_.6} parent=5 // pred_region
        %s123 = ssub.s32 %s15, 1
        // Predicated region
        $region13: #{_lambda_.6} parent=11 // pred_check
          %p124 = pneg %p62
        $region14: #{_lambda_.6} parent=11 // pred_check_branch
          %126 = sbr.rel (%p124) target = $region16
        $region15: #{_lambda_.6} parent=11 // pred_region
          _
        $region16: #{_lambda_.6} parent=11 // pred_fallthru
          _
        // Predicated region
        $region17: #{_lambda_.6} parent=11 // pred_check
          %p127 = pneg %p83
        $region18: #{_lambda_.6} parent=11 // pred_check_branch
          %129 = sbr.rel (%p127) target = $region20
        $region19: #{_lambda_.6} parent=11 // pred_region
          _
        $region20: #{_lambda_.6} parent=11 // pred_fallthru
          _
      $region12: #{_lambda_.6} parent=5 // pred_fallthru
        _
      %p130 = scmp.lt.s32.totalorder %s15, 2
      // Predicated region
      $region21: #{_lambda_.6} parent=5 // pred_check
        %p131 = pneg %p130
      $region22: #{_lambda_.6} parent=5 // pred_check_branch
        %133 = sbr.rel (%p131) target = $region24
      $region23: #{_lambda_.6} parent=5 // pred_region
        // Predicated region
        $region25: #{_lambda_.6} parent=23 // pred_check
          %p134 = pneg %p35
        $region26: #{_lambda_.6} parent=23 // pred_check_branch
          %136 = sbr.rel (%p134) target = $region28
        $region27: #{_lambda_.6} parent=23 // pred_region
          %s137 = smul.u32 2, %s15
          %p138 = scmp.lt.s32.totalorder %s137, 3
          %s139 = scalar_select %p138, %s137, 3
          %s140 = smul.addr %s139, 4
          %s141 = scalar_lea.vmem %s2, %s140
          %s142 = smul.u32 2, %s15
        $region28: #{_lambda_.6} parent=23 // pred_fallthru
          _
      $region24: #{_lambda_.6} parent=5 // pred_fallthru
        _
      %p143 = scmp.le.s32.totalorder 1, %s15
      %p144 = scmp.lt.s32.totalorder %s15, 3
      %p145 = pnand %p143, %p144
      %p146 = pneg %p145
      // Predicated region
      $region29: #{_lambda_.6} parent=5 // pred_check
        _
      $region30: #{_lambda_.6} parent=5 // pred_check_branch
        %148 = sbr.rel (%p145) target = $region32
      $region31: #{_lambda_.6} parent=5 // pred_region
        #allocation8 [shape = 'u8[24576]{0}', space=vmem, size = 0x6000, dematerialized = true, scoped, tag = 'FusionAdapter Buffer %fusion.1 = bf16[48,512]{1,0:T(8,128)(2,1)} fusion(%param_2.52, %param_3.24), kind=kLoop, calls=%fused_computation.45.clone, metadata={op_name="jit(<lambda>)/jit(_pad)/pad" stack_frame_id=16}']
        %s149 = ssub.s32 %s15, 1
        %s150 = smul.u32 2, %s20
        %p151 = scmp.lt.s32.totalorder %s150, 3
        %s152 = scalar_select %p151, %s150, 3
        %s153 = smul.addr %s152, 4
        %s154 = scalar_lea.vmem %s2, %s153
        %p155 = pneg %p41
        %p156 = pneg %p38
        %p157 = pneg %p62
        %p158 = pneg %p59
        %p159 = pneg %p83
        %p160 = pneg %p80
        %p161 = pneg %p109
        %p162 = pneg %p106
        %s163 = sand.u32 %s96, 1
        %s164 = sand.u32 %s96, 1
        %s165 = smul.addr %s164, 32
        %s166 = scalar_lea.vmem [#allocation7], %s165
        %s167 = smul.u32 2, %s20
        %p168 = scmp.lt.s32.totalorder %s167, 3
        %s169 = scalar_select %p168, %s167, 3
        %s170 = smul.addr %s169, 4
        %s171 = scalar_lea.vmem %s2, %s170
        %s172 = smul.u32 2, %s20
        %s173 = smul.u32 2, %s20
        %v174 = vld [vmem:[%s171] sm:$0xf]
        %v175 = vunpack.c.l.bf16 %v174
        %v176 = vunpack.c.h.bf16 %v174
        %v177 = vlaneseq
        %v178 = vshrl.u32 %v177, 7
        %vm180 = vcmp.lt.s32.totalorder %v178, 36
        %v181 = vsel %vm180, %v175, %v10
        %v182 = vpack.c.bf16 0.0, %v181
        %s184 = ssub.s32 16, 1
        %185 = vst [vmem:[#allocation8] sm:%s184] %v182
        %s186 = scalar_lea.vmem %s171, 4
        %v187 = vld [vmem:[%s186] sm:$0xf]
        %v188 = vunpack.c.l.bf16 %v187
        %v189 = vunpack.c.h.bf16 %v187
        %v190 = vlaneseq
        %v191 = vshrl.u32 %v190, 7
        %vm193 = vcmp.lt.s32.totalorder %v191, 36
        %v194 = vsel %vm193, %v188, %v10
        %s195 = scalar_lea.vmem [#allocation8], 4
        %v196 = vpack.c.bf16 0.0, %v194
        %s198 = ssub.s32 16, 1
        %199 = vst [vmem:[%s195] sm:%s198] %v196
        %s200 = scalar_lea.vmem %s171, 16
        %v201 = vld [vmem:[%s200] sm:$0xf]
        %v202 = vunpack.c.l.bf16 %v201
        %v203 = vunpack.c.h.bf16 %v201
        %v204 = vlaneseq
        %v205 = vshrl.u32 %v204, 7
        %v206 = vadd.s32 %v205, 8
        %vm207 = vcmp.lt.s32.totalorder %v206, 36
        %v208 = vsel %vm207, %v202, %v10
        %s209 = scalar_lea.vmem [#allocation8], 8
        %v210 = vpack.c.bf16 0.0, %v208
        %s212 = ssub.s32 16, 1
        %213 = vst [vmem:[%s209] sm:%s212] %v210
        %s214 = scalar_lea.vmem %s171, 20
        %v215 = vld [vmem:[%s214] sm:$0xf]
        %v216 = vunpack.c.l.bf16 %v215
        %v217 = vunpack.c.h.bf16 %v215
        %v218 = vlaneseq
        %v219 = vshrl.u32 %v218, 7
        %v220 = vadd.s32 %v219, 8
        %vm221 = vcmp.lt.s32.totalorder %v220, 36
        %v222 = vsel %vm221, %v216, %v10
        %s223 = scalar_lea.vmem [#allocation8], 12
        %v224 = vpack.c.bf16 0.0, %v222
        %s226 = ssub.s32 16, 1
        %227 = vst [vmem:[%s223] sm:%s226] %v224
        %s228 = scalar_lea.vmem %s171, 32
        %v229 = vld [vmem:[%s228] sm:$0xf]
        %v230 = vunpack.c.l.bf16 %v229
        %v231 = vunpack.c.h.bf16 %v229
        %v232 = vlaneseq
        %v233 = vshrl.u32 %v232, 7
        %v234 = vadd.s32 %v233, 16
        %vm235 = vcmp.lt.s32.totalorder %v234, 36
        %v236 = vsel %vm235, %v230, %v10
        %s237 = scalar_lea.vmem [#allocation8], 16
        %v238 = vpack.c.bf16 0.0, %v236
        %s240 = ssub.s32 16, 1
        %241 = vst [vmem:[%s237] sm:%s240] %v238
        %s242 = scalar_lea.vmem %s171, 36
        %v243 = vld [vmem:[%s242] sm:$0xf]
        %v244 = vunpack.c.l.bf16 %v243
        %v245 = vunpack.c.h.bf16 %v243
        %v246 = vlaneseq
        %v247 = vshrl.u32 %v246, 7
        %v248 = vadd.s32 %v247, 16
        %vm249 = vcmp.lt.s32.totalorder %v248, 36
        %v250 = vsel %vm249, %v244, %v10
        %s251 = scalar_lea.vmem [#allocation8], 20
        %v252 = vpack.c.bf16 0.0, %v250
        %s254 = ssub.s32 16, 1
        %255 = vst [vmem:[%s251] sm:%s254] %v252
        %s256 = scalar_lea.vmem %s171, 48
        %s258 = sor.u32 255, 127
        %s259 = sand.u32 %s258, 85
        %s260 = sshrl.u32 %s259, 1
        %s261 = sor.u32 %s259, %s260
        %s262 = sand.u32 51, %s261
        %s263 = sshrl.u32 %s262, 2
        %s264 = sor.u32 %s262, %s263
        %s265 = sand.u32 15, %s264
        %v266 = vld [vmem:[%s256] sm:%s265]
        %v267 = vunpack.c.l.bf16 %v266
        %v268 = vunpack.c.h.bf16 %v266
        %v269 = vlaneseq
        %v270 = vshrl.u32 %v269, 7
        %v271 = vadd.s32 %v270, 24
        %vm272 = vcmp.lt.s32.totalorder %v271, 36
        %v273 = vsel %vm272, %v267, %v10
        %s274 = scalar_lea.vmem [#allocation8], 24
        %v275 = vpack.c.bf16 0.0, %v273
        %s277 = ssub.s32 16, 1
        %278 = vst [vmem:[%s274] sm:%s277] %v275
        %s279 = scalar_lea.vmem %s171, 52
        %s281 = sor.u32 255, 127
        %s282 = sand.u32 %s281, 85
        %s283 = sshrl.u32 %s282, 1
        %s284 = sor.u32 %s282, %s283
        %s285 = sand.u32 51, %s284
        %s286 = sshrl.u32 %s285, 2
        %s287 = sor.u32 %s285, %s286
        %s288 = sand.u32 15, %s287
        %v289 = vld [vmem:[%s279] sm:%s288]
        %v290 = vunpack.c.l.bf16 %v289
        %v291 = vunpack.c.h.bf16 %v289
        %v292 = vlaneseq
        %v293 = vshrl.u32 %v292, 7
        %v294 = vadd.s32 %v293, 24
        %vm295 = vcmp.lt.s32.totalorder %v294, 36
        %v296 = vsel %vm295, %v290, %v10
        %s297 = scalar_lea.vmem [#allocation8], 28
        %v298 = vpack.c.bf16 0.0, %v296
        %s300 = ssub.s32 16, 1
        %301 = vst [vmem:[%s297] sm:%s300] %v298
        %s302 = scalar_lea.vmem %s171, 64
        %s304 = sor.u32 255, 127
        %s305 = sand.u32 %s304, 85
        %s306 = sshrl.u32 %s305, 1
        %s307 = sor.u32 %s305, %s306
        %s308 = sand.u32 51, %s307
        %s309 = sshrl.u32 %s308, 2
        %s310 = sor.u32 %s308, %s309
        %s311 = sand.u32 15, %s310
        %v312 = vld [vmem:[%s302] sm:%s311]
        %v313 = vunpack.c.l.bf16 %v312
        %v314 = vunpack.c.h.bf16 %v312
        %v315 = vlaneseq
        %v316 = vshrl.u32 %v315, 7
        %v317 = vadd.s32 %v316, 32
        %vm318 = vcmp.lt.s32.totalorder %v317, 36
        %v319 = vsel %vm318, %v313, %v10
        %s320 = scalar_lea.vmem [#allocation8], 32
        %v321 = vpack.c.bf16 0.0, %v319
        %s323 = ssub.s32 16, 1
        %324 = vst [vmem:[%s320] sm:%s323] %v321
        %s325 = scalar_lea.vmem %s171, 68
        %s327 = sor.u32 255, 127
        %s328 = sand.u32 %s327, 85
        %s329 = sshrl.u32 %s328, 1
        %s330 = sor.u32 %s328, %s329
        %s331 = sand.u32 51, %s330
        %s332 = sshrl.u32 %s331, 2
        %s333 = sor.u32 %s331, %s332
        %s334 = sand.u32 15, %s333
        %v335 = vld [vmem:[%s325] sm:%s334]
        %v336 = vunpack.c.l.bf16 %v335
        %v337 = vunpack.c.h.bf16 %v335
        %v338 = vlaneseq
        %v339 = vshrl.u32 %v338, 7
        %v340 = vadd.s32 %v339, 32
        %vm341 = vcmp.lt.s32.totalorder %v340, 36
        %v342 = vsel %vm341, %v336, %v10
        %s343 = scalar_lea.vmem [#allocation8], 36
        %v344 = vpack.c.bf16 0.0, %v342
        %s346 = ssub.s32 16, 1
        %347 = vst [vmem:[%s343] sm:%s346] %v344
        %s348 = scalar_lea.vmem [#allocation8], 40
        %v349 = vpack.c.bf16 0.0, %v10
        %s351 = ssub.s32 16, 1
        %352 = vst [vmem:[%s348] sm:%s351] %v349
        %s353 = scalar_lea.vmem [#allocation8], 44
        %v354 = vpack.c.bf16 0.0, %v10
        %s356 = ssub.s32 16, 1
        %357 = vst [vmem:[%s353] sm:%s356] %v354
        %v359 = vld [vmem:[%s0] sm:$0xf]
        %v360 = vld [vmem:[%s0 + $0x4] sm:$0xf]
        %v361 = vld [vmem:[%s0 + $0x8] sm:$0xf]
        %v362 = vld [vmem:[%s0 + $0xc] sm:$0xf]
        %v363 = vld [vmem:[#allocation8] sm:$0xff]
        %v364 = vld [vmem:[#allocation8 + $0x8] sm:$0xff]
        %v365 = vld [vmem:[#allocation8 + $0x10] sm:$0xff]
        %v366 = vld [vmem:[#allocation8 + $0x18] sm:$0xff]
        %v367 = vld [vmem:[#allocation8 + $0x20] sm:$0xff]
        %v368 = vld [vmem:[#allocation8 + $0x28] sm:$0xff]
        %v369 = vld [vmem:[%s1] sm:$0xff]
        %v370 = vld [vmem:[%s1 + $0x8] sm:$0xff]
        %v371 = vld [vmem:[%s1 + $0x10] sm:$0xff]
        %v372 = vld [vmem:[%s1 + $0x18] sm:$0xff]
        %374 = vset.pattern.permute.xlu0 0
        %375 = vperm.xlu0 %374, %v369
        %v376 = vpop.permute.xlu0 %375
        %379 = vset.pattern.permute.xlu0 0
        %380 = vperm.xlu0 %379, %v370
        %v381 = vpop.permute.xlu0 %380
        %384 = vset.pattern.permute.xlu0 0
        %385 = vperm.xlu0 %384, %v371
        %v386 = vpop.permute.xlu0 %385
        %389 = vset.pattern.permute.xlu0 0
        %390 = vperm.xlu0 %389, %v372
        %v391 = vpop.permute.xlu0 %390
        %v397 = vunpack.c.l.b16 %v359
        %v398 = vunpack.c.l.b16 %v360
        %v399 = vunpack.c.l.b16 %v361
        %v400 = vunpack.c.l.b16 %v362
        %v401 = vpack.c.b16 %v398, %v397
        %v402 = vpack.c.b16 %v400, %v399
        %v409 = vunpack.c.l.b16 %v363
        %v410 = vunpack.c.h.b16 %v363
        %v411 = vunpack.c.l.b16 %v364
        %v412 = vunpack.c.h.b16 %v364
        %v413 = vunpack.c.l.b16 %v365
        %v414 = vunpack.c.h.b16 %v365
        %v415 = vunpack.c.l.b16 %v366
        %v416 = vunpack.c.h.b16 %v366
        %v417 = vunpack.c.l.b16 %v367
        %v418 = vunpack.c.h.b16 %v367
        %v419 = vunpack.c.l.b16 %v368
        %v420 = vunpack.c.h.b16 %v368
        %v421 = vpack.c.b16 %v411, %v409
        %v422 = vpack.c.b16 %v412, %v410
        %v423 = vpack.c.b16 %v415, %v413
        %v424 = vpack.c.b16 %v416, %v414
        %v425 = vpack.c.b16 %v419, %v417
        %v426 = vpack.c.b16 %v420, %v418
        %vm433 = vcmask 392192
        %v435 = vsel %vm433, %v401, 0
        %v438 = vsel %vm433, %v402, 0
        %440 = vmatpush.bf16.msra.mxu0 0
        %441 = vmatpush.bf16.msra.mxu0 0
        %442 = vmatpush.bf16.msra.mxu0 0
        %443 = vmatpush.bf16.msra.mxu0 0
        %444 = vmatpush.bf16.msra.mxu0 0
        %445 = vmatpush.bf16.msra.mxu0 %v425
        %446 = vmatpush.bf16.msra.mxu0 %v423
        %447 = vmatpush.bf16.msra.mxu0 %v421
        %448 = vmatmul.bf16.gmra.mxu0 %v435
        %v449 = vpop.f32.mrf.mxu0
        %v450 = vadd.f32 %v376, %v449
        %v451 = vpop.f32.mrf.mxu0
        %v452 = vadd.f32 %v381, %v451
        %453 = vmatmul.bf16.gmra.mxu0 %v438
        %v454 = vpop.f32.mrf.mxu0
        %v455 = vadd.f32 %v386, %v454
        %v456 = vpop.f32.mrf.mxu0
        %v457 = vadd.f32 %v391, %v456
        %458 = vdwg.mxu0
        %459 = vmatpush.bf16.msra.mxu0 0
        %460 = vmatpush.bf16.msra.mxu0 0
        %461 = vmatpush.bf16.msra.mxu0 0
        %462 = vmatpush.bf16.msra.mxu0 0
        %463 = vmatpush.bf16.msra.mxu0 0
        %464 = vmatpush.bf16.msra.mxu0 %v426
        %465 = vmatpush.bf16.msra.mxu0 %v424
        %466 = vmatpush.bf16.msra.mxu0 %v422
        %467 = vmatmul.bf16.gmra.mxu0 %v435
        %v468 = vpop.f32.mrf.mxu0
        %v469 = vadd.f32 %v376, %v468
        %v470 = vpop.f32.mrf.mxu0
        %v471 = vadd.f32 %v381, %v470
        %472 = vmatmul.bf16.gmra.mxu0 %v438
        %v473 = vpop.f32.mrf.mxu0
        %v474 = vadd.f32 %v386, %v473
        %v475 = vpop.f32.mrf.mxu0
        %v476 = vadd.f32 %v391, %v475
        %477 = vdwg.mxu0
        %v478 = vlaneseq
        %v479 = vshrl.u32 %v478, 7
        %v480 = vadd.s32 %v479, 8
        %v481 = vadd.s32 %v479, 16
        %v482 = vadd.s32 %v479, 24
        %v483 = vlaneseq
        %v484 = vand.u32 %v483, 127
        %v485 = vadd.s32 %v484, 128
        %vm486 = vcmp.ge.s32.totalorder %v479, 0
        %vm487 = vcmp.ge.s32.totalorder %v480, 0
        %vm488 = vcmp.ge.s32.totalorder %v481, 0
        %vm489 = vcmp.ge.s32.totalorder %v482, 0
        %vm490 = vcmp.lt.s32.totalorder %v479, 16
        %vm491 = vcmp.lt.s32.totalorder %v480, 16
        %vm492 = vcmp.lt.s32.totalorder %v481, 16
        %vm493 = vcmp.lt.s32.totalorder %v482, 16
        %vm494 = vmand %vm486, %vm490
        %vm495 = vmand %vm487, %vm491
        %vm496 = vmand %vm488, %vm492
        %vm497 = vmand %vm489, %vm493
        %vm498 = vcmp.ge.s32.totalorder %v484, 0
        %vm499 = vcmp.ge.s32.totalorder %v485, 0
        %vm500 = vmand %vm494, %vm498
        %vm501 = vmand %vm494, %vm499
        %vm502 = vmand %vm495, %vm498
        %vm503 = vmand %vm495, %vm499
        %vm504 = vmand %vm496, %vm498
        %vm505 = vmand %vm496, %vm499
        %vm506 = vmand %vm497, %vm498
        %vm507 = vmand %vm497, %vm499
        %vm508 = vcmp.lt.s32.totalorder %v484, 256
        %vm509 = vcmp.lt.s32.totalorder %v485, 256
        %vm510 = vmand %vm500, %vm508
        %vm511 = vmand %vm501, %vm509
        %vm512 = vmand %vm502, %vm508
        %vm513 = vmand %vm503, %vm509
        %vm514 = vmand %vm504, %vm508
        %vm515 = vmand %vm505, %vm509
        %vm516 = vmand %vm506, %vm508
        %vm517 = vmand %vm507, %vm509
        %v518 = vsel %vm510, %v450, 0.0
        %v519 = vsel %vm511, %v469, 0.0
        %v520 = vsel %vm512, %v452, 0.0
        %v521 = vsel %vm513, %v471, 0.0
        %v522 = vsel %vm514, %v455, 0.0
        %v523 = vsel %vm515, %v474, 0.0
        %v524 = vsel %vm516, %v457, 0.0
        %v525 = vsel %vm517, %v476, 0.0
        %v526 = vadd.f32 %v518, %v519
        %527 = vadd.xlane.f32.xlu0 %v526
        %v528 = vpop.xlane.xlu0 %527
        %v529 = vadd.f32 %v520, %v521
        %530 = vadd.xlane.f32.xlu0 %v529
        %v531 = vpop.xlane.xlu0 %530
        %v532 = vadd.f32 %v522, %v523
        %533 = vadd.xlane.f32.xlu0 %v532
        %v534 = vpop.xlane.xlu0 %533
        %v535 = vadd.f32 %v524, %v525
        %536 = vadd.xlane.f32.xlu0 %v535
        %v537 = vpop.xlane.xlu0 %536
        %v538 = vadd.f32 %v528, %v531
        %v539 = vadd.f32 %v538, %v534
        %v540 = vadd.f32 %v539, %v537
        %v541 = vrot.slane %v540, 4
        %v542 = vadd.f32 %v540, %v541
        %v543 = vrot.slane %v542, 2
        %v544 = vadd.f32 %v542, %v543
        %v545 = vrot.slane %v544, 1
        %v546 = vadd.f32 %v544, %v545
        %v547 = vmul.f32 %v546, 0.00024414063
        %v548 = vsub.f32 %v450, %v547
        %v549 = vsub.f32 %v469, %v547
        %v550 = vsub.f32 %v452, %v547
        %v551 = vsub.f32 %v471, %v547
        %v552 = vsub.f32 %v455, %v547
        %v553 = vsub.f32 %v474, %v547
        %v554 = vsub.f32 %v457, %v547
        %v555 = vsub.f32 %v476, %v547
        %v556 = vsel %vm510, %v548, 0.0
        %v557 = vsel %vm511, %v549, 0.0
        %v558 = vsel %vm512, %v550, 0.0
        %v559 = vsel %vm513, %v551, 0.0
        %v560 = vsel %vm514, %v552, 0.0
        %v561 = vsel %vm515, %v553, 0.0
        %v562 = vsel %vm516, %v554, 0.0
        %v563 = vsel %vm517, %v555, 0.0
        %v564 = vmul.f32 %v556, %v556
        %v565 = vmul.f32 %v557, %v557
        %v566 = vmul.f32 %v558, %v558
        %v567 = vmul.f32 %v559, %v559
        %v568 = vmul.f32 %v560, %v560
        %v569 = vmul.f32 %v561, %v561
        %v570 = vmul.f32 %v562, %v562
        %v571 = vmul.f32 %v563, %v563
        %v572 = vadd.f32 %v564, %v565
        %573 = vadd.xlane.f32.xlu0 %v572
        %v574 = vpop.xlane.xlu0 %573
        %v575 = vadd.f32 %v566, %v567
        %576 = vadd.xlane.f32.xlu0 %v575
        %v577 = vpop.xlane.xlu0 %576
        %v578 = vadd.f32 %v568, %v569
        %579 = vadd.xlane.f32.xlu0 %v578
        %v580 = vpop.xlane.xlu0 %579
        %v581 = vadd.f32 %v570, %v571
        %582 = vadd.xlane.f32.xlu0 %v581
        %v583 = vpop.xlane.xlu0 %582
        %v584 = vadd.f32 %v574, %v577
        %v585 = vadd.f32 %v584, %v580
        %v586 = vadd.f32 %v585, %v583
        %v587 = vrot.slane %v586, 4
        %v588 = vadd.f32 %v586, %v587
        %v589 = vrot.slane %v588, 2
        %v590 = vadd.f32 %v588, %v589
        %v591 = vrot.slane %v590, 1
        %v592 = vadd.f32 %v590, %v591
        %v593 = vmul.f32 %v592, 0.00024414063
        %v594 = vadd.f32 %v593, 1e-05
        %v595 = vrsqrt.pop %v594
        %v596 = vmul.f32 %v595, %v594
        %v597 = vmul.f32 %v596, %v595
        %v598 = vmul.f32 0.5, %v597
        %v599 = vsub.f32 1.5, %v598
        %v600 = vmul.f32 %v595, %v599
        %vm601 = vweird.f32 %v594
        %vm602 = vweird.f32 %v595
        %vm603 = vmor %vm601, %vm602
        %v604 = vsel %vm603, %v595, %v600
        %v605 = vmul.f32 %v548, %v604
        %v606 = vmul.f32 %v549, %v604
        %v607 = vmul.f32 %v550, %v604
        %v608 = vmul.f32 %v551, %v604
        %v609 = vmul.f32 %v552, %v604
        %v610 = vmul.f32 %v553, %v604
        %v611 = vmul.f32 %v554, %v604
        %v612 = vmul.f32 %v555, %v604
        %v613 = vsel %vm510, %v605, %v450
        %v614 = vsel %vm511, %v606, %v469
        %v615 = vsel %vm512, %v607, %v452
        %v616 = vsel %vm513, %v608, %v471
        %v617 = vsel %vm514, %v609, %v455
        %v618 = vsel %vm515, %v610, %v474
        %v619 = vsel %vm516, %v611, %v457
        %v620 = vsel %vm517, %v612, %v476
        %vm621 = vcmp.ge.s32.totalorder %v479, 16
        %vm622 = vcmp.ge.s32.totalorder %v480, 16
        %vm623 = vcmp.ge.s32.totalorder %v481, 16
        %vm624 = vcmp.ge.s32.totalorder %v482, 16
        %vm625 = vcmp.lt.s32.totalorder %v479, 32
        %vm626 = vcmp.lt.s32.totalorder %v480, 32
        %vm627 = vcmp.lt.s32.totalorder %v481, 32
        %vm628 = vcmp.lt.s32.totalorder %v482, 32
        %vm629 = vmand %vm621, %vm625
        %vm630 = vmand %vm622, %vm626
        %vm631 = vmand %vm623, %vm627
        %vm632 = vmand %vm624, %vm628
        %vm633 = vmand %vm629, %vm498
        %vm634 = vmand %vm629, %vm499
        %vm635 = vmand %vm630, %vm498
        %vm636 = vmand %vm630, %vm499
        %vm637 = vmand %vm631, %vm498
        %vm638 = vmand %vm631, %vm499
        %vm639 = vmand %vm632, %vm498
        %vm640 = vmand %vm632, %vm499
        %vm641 = vmand %vm633, %vm508
        %vm642 = vmand %vm634, %vm509
        %vm643 = vmand %vm635, %vm508
        %vm644 = vmand %vm636, %vm509
        %vm645 = vmand %vm637, %vm508
        %vm646 = vmand %vm638, %vm509
        %vm647 = vmand %vm639, %vm508
        %vm648 = vmand %vm640, %vm509
        %v649 = vsel %vm641, %v450, 0.0
        %v650 = vsel %vm642, %v469, 0.0
        %v651 = vsel %vm643, %v452, 0.0
        %v652 = vsel %vm644, %v471, 0.0
        %v653 = vsel %vm645, %v455, 0.0
        %v654 = vsel %vm646, %v474, 0.0
        %v655 = vsel %vm647, %v457, 0.0
        %v656 = vsel %vm648, %v476, 0.0
        %v657 = vadd.f32 %v649, %v650
        %658 = vadd.xlane.f32.xlu0 %v657
        %v659 = vpop.xlane.xlu0 %658
        %v660 = vadd.f32 %v651, %v652
        %661 = vadd.xlane.f32.xlu0 %v660
        %v662 = vpop.xlane.xlu0 %661
        %v663 = vadd.f32 %v653, %v654
        %664 = vadd.xlane.f32.xlu0 %v663
        %v665 = vpop.xlane.xlu0 %664
        %v666 = vadd.f32 %v655, %v656
        %667 = vadd.xlane.f32.xlu0 %v666
        %v668 = vpop.xlane.xlu0 %667
        %v669 = vadd.f32 %v659, %v662
        %v670 = vadd.f32 %v669, %v665
        %v671 = vadd.f32 %v670, %v668
        %v672 = vrot.slane %v671, 4
        %v673 = vadd.f32 %v671, %v672
        %v674 = vrot.slane %v673, 2
        %v675 = vadd.f32 %v673, %v674
        %v676 = vrot.slane %v675, 1
        %v677 = vadd.f32 %v675, %v676
        %v678 = vmul.f32 %v677, 0.00024414063
        %v679 = vsub.f32 %v450, %v678
        %v680 = vsub.f32 %v469, %v678
        %v681 = vsub.f32 %v452, %v678
        %v682 = vsub.f32 %v471, %v678
        %v683 = vsub.f32 %v455, %v678
        %v684 = vsub.f32 %v474, %v678
        %v685 = vsub.f32 %v457, %v678
        %v686 = vsub.f32 %v476, %v678
        %v687 = vsel %vm641, %v679, 0.0
        %v688 = vsel %vm642, %v680, 0.0
        %v689 = vsel %vm643, %v681, 0.0
        %v690 = vsel %vm644, %v682, 0.0
        %v691 = vsel %vm645, %v683, 0.0
        %v692 = vsel %vm646, %v684, 0.0
        %v693 = vsel %vm647, %v685, 0.0
        %v694 = vsel %vm648, %v686, 0.0
        %v695 = vmul.f32 %v687, %v687
        %v696 = vmul.f32 %v688, %v688
        %v697 = vmul.f32 %v689, %v689
        %v698 = vmul.f32 %v690, %v690
        %v699 = vmul.f32 %v691, %v691
        %v700 = vmul.f32 %v692, %v692
        %v701 = vmul.f32 %v693, %v693
        %v702 = vmul.f32 %v694, %v694
        %v703 = vadd.f32 %v695, %v696
        %704 = vadd.xlane.f32.xlu0 %v703
        %v705 = vpop.xlane.xlu0 %704
        %v706 = vadd.f32 %v697, %v698
        %707 = vadd.xlane.f32.xlu0 %v706
        %v708 = vpop.xlane.xlu0 %707
        %v709 = vadd.f32 %v699, %v700
        %710 = vadd.xlane.f32.xlu0 %v709
        %v711 = vpop.xlane.xlu0 %710
        %v712 = vadd.f32 %v701, %v702
        %713 = vadd.xlane.f32.xlu0 %v712
        %v714 = vpop.xlane.xlu0 %713
        %v715 = vadd.f32 %v705, %v708
        %v716 = vadd.f32 %v715, %v711
        %v717 = vadd.f32 %v716, %v714
        %v718 = vrot.slane %v717, 4
        %v719 = vadd.f32 %v717, %v718
        %v720 = vrot.slane %v719, 2
        %v721 = vadd.f32 %v719, %v720
        %v722 = vrot.slane %v721, 1
        %v723 = vadd.f32 %v721, %v722
        %v724 = vmul.f32 %v723, 0.00024414063
        %v725 = vadd.f32 %v724, 1e-05
        %v726 = vrsqrt.pop %v725
        %v727 = vmul.f32 %v726, %v725
        %v728 = vmul.f32 %v727, %v726
        %v729 = vmul.f32 0.5, %v728
        %v730 = vsub.f32 1.5, %v729
        %v731 = vmul.f32 %v726, %v730
        %vm732 = vweird.f32 %v725
        %vm733 = vweird.f32 %v726
        %vm734 = vmor %vm732, %vm733
        %v735 = vsel %vm734, %v726, %v731
        %v736 = vmul.f32 %v679, %v735
        %v737 = vmul.f32 %v680, %v735
        %v738 = vmul.f32 %v681, %v735
        %v739 = vmul.f32 %v682, %v735
        %v740 = vmul.f32 %v683, %v735
        %v741 = vmul.f32 %v684, %v735
        %v742 = vmul.f32 %v685, %v735
        %v743 = vmul.f32 %v686, %v735
        %v744 = vsel %vm641, %v736, %v613
        %v745 = vsel %vm642, %v737, %v614
        %v746 = vsel %vm643, %v738, %v615
        %v747 = vsel %vm644, %v739, %v616
        %v748 = vsel %vm645, %v740, %v617
        %v749 = vsel %vm646, %v741, %v618
        %v750 = vsel %vm647, %v742, %v619
        %v751 = vsel %vm648, %v743, %v620
        %752 = vset.pattern.permute.xlu0 1
        %753 = vperm.xlu0 %752, %v369
        %v754 = vpop.permute.xlu0 %753
        %756 = vset.pattern.permute.xlu0 1
        %757 = vperm.xlu0 %756, %v370
        %v758 = vpop.permute.xlu0 %757
        %760 = vset.pattern.permute.xlu0 1
        %761 = vperm.xlu0 %760, %v371
        %v762 = vpop.permute.xlu0 %761
        %764 = vset.pattern.permute.xlu0 1
        %765 = vperm.xlu0 %764, %v372
        %v766 = vpop.permute.xlu0 %765
        %v768 = vmul.f32 %v744, %v754
        %v769 = vmul.f32 %v745, %v754
        %v770 = vmul.f32 %v746, %v758
        %v771 = vmul.f32 %v747, %v758
        %v772 = vmul.f32 %v748, %v762
        %v773 = vmul.f32 %v749, %v762
        %v774 = vmul.f32 %v750, %v766
        %v775 = vmul.f32 %v751, %v766
        %776 = vset.pattern.permute.xlu0 2
        %777 = vperm.xlu0 %776, %v369
        %v778 = vpop.permute.xlu0 %777
        %780 = vset.pattern.permute.xlu0 2
        %781 = vperm.xlu0 %780, %v370
        %v782 = vpop.permute.xlu0 %781
        %784 = vset.pattern.permute.xlu0 2
        %785 = vperm.xlu0 %784, %v371
        %v786 = vpop.permute.xlu0 %785
        %788 = vset.pattern.permute.xlu0 2
        %789 = vperm.xlu0 %788, %v372
        %v790 = vpop.permute.xlu0 %789
        %v792 = vadd.f32 %v768, %v778
        %v793 = vadd.f32 %v769, %v778
        %v794 = vadd.f32 %v770, %v782
        %v795 = vadd.f32 %v771, %v782
        %v796 = vadd.f32 %v772, %v786
        %v797 = vadd.f32 %v773, %v786
        %v798 = vadd.f32 %v774, %v790
        %v799 = vadd.f32 %v775, %v790
        %vm800 = vcmp.gt.f32.partialorder %v792, 0.0
        %vm801 = vcmp.gt.f32.partialorder %v793, 0.0
        %vm802 = vcmp.gt.f32.partialorder %v794, 0.0
        %vm803 = vcmp.gt.f32.partialorder %v795, 0.0
        %vm804 = vcmp.gt.f32.partialorder %v796, 0.0
        %vm805 = vcmp.gt.f32.partialorder %v797, 0.0
        %vm806 = vcmp.gt.f32.partialorder %v798, 0.0
        %vm807 = vcmp.gt.f32.partialorder %v799, 0.0
        %v808 = vmul.f32 %v792, 0.2
        %v809 = vmul.f32 %v793, 0.2
        %v810 = vmul.f32 %v794, 0.2
        %v811 = vmul.f32 %v795, 0.2
        %v812 = vmul.f32 %v796, 0.2
        %v813 = vmul.f32 %v797, 0.2
        %v814 = vmul.f32 %v798, 0.2
        %v815 = vmul.f32 %v799, 0.2
        %v816 = vsel %vm800, %v792, %v808
        %v817 = vsel %vm801, %v793, %v809
        %v818 = vsel %vm802, %v794, %v810
        %v819 = vsel %vm803, %v795, %v811
        %v820 = vsel %vm804, %v796, %v812
        %v821 = vsel %vm805, %v797, %v813
        %v822 = vsel %vm806, %v798, %v814
        %v823 = vsel %vm807, %v799, %v815
        %v824 = vpack.c.bf16 %v817, %v816
        %v825 = vpack.c.bf16 %v819, %v818
        %v826 = vpack.c.bf16 %v821, %v820
        %v827 = vpack.c.bf16 %v823, %v822
        %828 = vst [vmem:[%s166] sm:$0xff] %v824
        %829 = vst [vmem:[%s166 + $0x8] sm:$0xff] %v825
        %830 = vst [vmem:[%s166 + $0x10] sm:$0xff] %v826
        %831 = vst [vmem:[%s166 + $0x18] sm:$0xff] %v827
        %s832 = sand.u32 %s96, 1
        %s833 = sand.u32 %s96, 1
        %s834 = smul.addr %s833, 32
        %s835 = scalar_lea.vmem [#allocation7], %s834
        // Predicated region
        $region33: #{_lambda_.6} parent=31 // pred_check
          %p836 = pneg %p106
        $region34: #{_lambda_.6} parent=31 // pred_check_branch
          %838 = sbr.rel (%p836) target = $region36
        $region35: #{_lambda_.6} parent=31 // pred_region
          %s839 = smul.u32 2, %s20
          %s840 = smul.addr %s839, 4
          %s841 = scalar_lea.vmem %s4, %s840
          // Predicated region
          $region37: #{_lambda_.6} parent=35 // pred_check
            _
          $region38: #{_lambda_.6} parent=35 // pred_check_branch
            %843 = sbr.rel (0) target = $region40
          $region39: #{_lambda_.6} parent=35 // pred_region
            // Predicated region
            $region41: #{_lambda_.6} parent=39 // pred_check
              _
            $region42: #{_lambda_.6} parent=39 // pred_check_branch
              %845 = sbr.rel (0) target = $region44
            $region43: #{_lambda_.6} parent=39 // pred_region
              // Predicated region
              $region56: #{_lambda_.6} parent=43 // pred_check
                _
              $region57: #{_lambda_.6} parent=43 // pred_check_branch
                %867 = sbr.rel (0) target = $region59
              $region58: #{_lambda_.6} parent=43 // pred_region
                loop: start=0, step=1, limit=1
                $region60: #{_lambda_.6} parent=58 // loop_pre_header
                  _
                $region61: #{_lambda_.6} parent=58 // loop_header
                  %s869 = sphi 0, %s873
                  %p870 = scmp.ge.s32.totalorder %s869, 1
                  %s874 = sphi %s835, %s835
                  %s875 = sphi %s841, %s841
                $region62: #{_lambda_.6} parent=58 // loop_header_branch
                  %872 = sbr.rel (%p870) target = $region66
                $region63: #{_lambda_.6} parent=58 // loop_body
                  %v876 = vld [vmem:[%s874] sm:$0xff]
                  %877 = vst [vmem:[%s875] sm:$0xff] %v876
                  %v878 = vld [vmem:[%s874 + $0x8] sm:$0xff]
                  %879 = vst [vmem:[%s875 + $0x10] sm:$0xff] %v878
                  %v880 = vld [vmem:[%s874 + $0x10] sm:$0xff]
                  %881 = vst [vmem:[%s875 + $0x20] sm:$0xff] %v880
                  %v882 = vld [vmem:[%s874 + $0x18] sm:$0xff]
                  %883 = vst [vmem:[%s875 + $0x30] sm:$0xff] %v882
                $region64: #{_lambda_.6} parent=58 // loop_footer
                  %s873 = sadd.s32 1, %s869
                $region65: #{_lambda_.6} parent=58 // loop_footer_branch
                  %868 = sbr.rel target = $region61
                $region66: #{_lambda_.6} parent=58 // loop_exit
                  _
              $region59: #{_lambda_.6} parent=43 // pred_fallthru
                _
              // Predicated region
              $region67: #{_lambda_.6} parent=43 // pred_check
                _
              $region68: #{_lambda_.6} parent=43 // pred_check_branch
                %885 = sbr.rel target = $region70
              $region69: #{_lambda_.6} parent=43 // pred_region
                _
              $region70: #{_lambda_.6} parent=43 // pred_fallthru
                _
            $region44: #{_lambda_.6} parent=39 // pred_fallthru
              _
            // Predicated region
            $region45: #{_lambda_.6} parent=39 // pred_check
              _
            $region46: #{_lambda_.6} parent=39 // pred_check_branch
              %847 = sbr.rel target = $region48
            $region47: #{_lambda_.6} parent=39 // pred_region
              %s849 = ssub.s32 256, 1
              loop: start=0, step=1, limit=1
              $region49: #{_lambda_.6} parent=47 // loop_pre_header
                _
              $region50: #{_lambda_.6} parent=47 // loop_header
                %s851 = sphi 0, %s855
                %p852 = scmp.ge.s32.totalorder %s851, 1
                %s856 = sphi %s835, %s835
                %s857 = sphi %s841, %s841
              $region51: #{_lambda_.6} parent=47 // loop_header_branch
                %854 = sbr.rel (%p852) target = $region55
              $region52: #{_lambda_.6} parent=47 // loop_body
                %v858 = vld [vmem:[%s856] sm:%s849]
                %859 = vst [vmem:[%s857] sm:%s849] %v858
                %v860 = vld [vmem:[%s856 + $0x8] sm:%s849]
                %861 = vst [vmem:[%s857 + $0x10] sm:%s849] %v860
                %v862 = vld [vmem:[%s856 + $0x10] sm:%s849]
                %863 = vst [vmem:[%s857 + $0x20] sm:%s849] %v862
                %v864 = vld [vmem:[%s856 + $0x18] sm:%s849]
                %865 = vst [vmem:[%s857 + $0x30] sm:%s849] %v864
              $region53: #{_lambda_.6} parent=47 // loop_footer
                %s855 = sadd.s32 1, %s851
              $region54: #{_lambda_.6} parent=47 // loop_footer_branch
                %850 = sbr.rel target = $region50
              $region55: #{_lambda_.6} parent=47 // loop_exit
                _
            $region48: #{_lambda_.6} parent=39 // pred_fallthru
              _
          $region40: #{_lambda_.6} parent=35 // pred_fallthru
            _
          %886 = vnop
        $region36: #{_lambda_.6} parent=31 // pred_fallthru
          _
      $region32: #{_lambda_.6} parent=5 // pred_fallthru
        _
      %p887 = scmp.le.s32.totalorder 2, %s15
      // Predicated region
      $region71: #{_lambda_.6} parent=5 // pred_check
        %p888 = pneg %p887
      $region72: #{_lambda_.6} parent=5 // pred_check_branch
        %890 = sbr.rel (%p888) target = $region74
      $region73: #{_lambda_.6} parent=5 // pred_region
        %s891 = ssub.s32 %s15, 2
        // Predicated region
        $region75: #{_lambda_.6} parent=73 // pred_check
          %p892 = pneg %p112
        $region76: #{_lambda_.6} parent=73 // pred_check_branch
          %894 = sbr.rel (%p892) target = $region78
        $region77: #{_lambda_.6} parent=73 // pred_region
          %s895 = sand.u32 %s97, 1
          %s896 = sand.u32 %s97, 1
          %s897 = smul.addr %s896, 32
          %s898 = scalar_lea.vmem [#allocation7], %s897
        $region78: #{_lambda_.6} parent=73 // pred_fallthru
          _
      $region74: #{_lambda_.6} parent=5 // pred_fallthru
        _
    $region6: #{_lambda_.6} parent=1 // loop_footer
      %s19 = sadd.s32 1, %s15
    $region7: #{_lambda_.6} parent=1 // loop_footer_branch
      %14 = sbr.rel target = $region3
    $region8: #{_lambda_.6} parent=1 // loop_exit
      _

// kernel: _lambda_.4
$region0: #{_lambda_.4}
  #allocation0 [shape = 'u32[]', space=smem, size = 0x4, offset = 0x4, fixed_abs, tag = 'smem constant byte address 0x4 - core index']
  #allocation1 [shape = 'u32[72,128]{1,0:T(1,128)}', space=vmem, size = 0x9000, scoped, tag = 'internal scratch']
  %s0 = inlined_call_operand.vmem [shape: bf16[288,128], index: 0, kind: input, shape index: {}]
  %s1 = inlined_call_operand.vmem [shape: bf16[32,288], index: 1, kind: input, shape index: {}]
  %s2 = inlined_call_operand.vmem [shape: f32[32,3], index: 2, kind: input, shape index: {}]
  %s3 = inlined_call_operand.vmem [shape: bf16[32,128], index: 3, kind: output, shape index: {}]
  %s4 = sld [smem:[#allocation0]]
  $region22: #{_lambda_.4} parent=0
    _
  %s6 = ssub.s32 1, %s4
  %s7 = scalar_select 0, %s6, %s4
  // Predicated region
  $region2: #{_lambda_.4} parent=0 // pred_check
    _
  $region3: #{_lambda_.4} parent=0 // pred_check_branch
    %9 = sbr.rel (0) target = $region5
  $region4: #{_lambda_.4} parent=0 // pred_region
    _
  $region5: #{_lambda_.4} parent=0 // pred_fallthru
    _
  // Predicated region
  $region6: #{_lambda_.4} parent=0 // pred_check
    _
  $region7: #{_lambda_.4} parent=0 // pred_check_branch
    %11 = sbr.rel (0) target = $region9
  $region8: #{_lambda_.4} parent=0 // pred_region
    _
  $region9: #{_lambda_.4} parent=0 // pred_fallthru
    _
  // Predicated region
  $region10: #{_lambda_.4} parent=0 // pred_check
    _
  $region11: #{_lambda_.4} parent=0 // pred_check_branch
    %13 = sbr.rel (0) target = $region13
  $region12: #{_lambda_.4} parent=0 // pred_region
    _
  $region13: #{_lambda_.4} parent=0 // pred_fallthru
    _
  %v15 = vld [vmem:[%s1] sm:$0xff]
  %v16 = vld [vmem:[%s1 + $0x8] sm:$0xf]
  %v17 = vld [vmem:[%s1 + $0xc] sm:$0xff]
  %v18 = vld [vmem:[%s1 + $0x14] sm:$0xf]
  %v19 = vld [vmem:[%s1 + $0x18] sm:$0xff]
  %v20 = vld [vmem:[%s1 + $0x20] sm:$0xf]
  %v21 = vld [vmem:[%s1 + $0x24] sm:$0xff]
  %v22 = vld [vmem:[%s1 + $0x2c] sm:$0xf]
  %v23 = vld [vmem:[%s0] sm:$0xf]
  %v24 = vld [vmem:[%s0 + $0x4] sm:$0xf]
  %v25 = vld [vmem:[%s0 + $0x8] sm:$0xf]
  %v26 = vld [vmem:[%s0 + $0xc] sm:$0xf]
  %v27 = vld [vmem:[%s0 + $0x10] sm:$0xf]
  %v28 = vld [vmem:[%s0 + $0x14] sm:$0xf]
  %v29 = vld [vmem:[%s0 + $0x18] sm:$0xf]
  %v30 = vld [vmem:[%s0 + $0x1c] sm:$0xf]
  %v31 = vld [vmem:[%s0 + $0x20] sm:$0xf]
  %v32 = vld [vmem:[%s0 + $0x24] sm:$0xf]
  %v33 = vld [vmem:[%s0 + $0x28] sm:$0xf]
  %v34 = vld [vmem:[%s0 + $0x2c] sm:$0xf]
  %v35 = vld [vmem:[%s0 + $0x30] sm:$0xf]
  %v36 = vld [vmem:[%s0 + $0x34] sm:$0xf]
  %v37 = vld [vmem:[%s0 + $0x38] sm:$0xf]
  %v38 = vld [vmem:[%s0 + $0x3c] sm:$0xf]
  %v39 = vld [vmem:[%s0 + $0x40] sm:$0xf]
  %v40 = vld [vmem:[%s0 + $0x44] sm:$0xf]
  %v41 = vld [vmem:[%s0 + $0x48] sm:$0xf]
  %v42 = vld [vmem:[%s0 + $0x4c] sm:$0xf]
  %v43 = vld [vmem:[%s0 + $0x50] sm:$0xf]
  %v44 = vld [vmem:[%s0 + $0x54] sm:$0xf]
  %v45 = vld [vmem:[%s0 + $0x58] sm:$0xf]
  %v46 = vld [vmem:[%s0 + $0x5c] sm:$0xf]
  %v47 = vld [vmem:[%s0 + $0x60] sm:$0xf]
  %v48 = vld [vmem:[%s0 + $0x64] sm:$0xf]
  %v49 = vld [vmem:[%s0 + $0x68] sm:$0xf]
  %v50 = vld [vmem:[%s0 + $0x6c] sm:$0xf]
  %v51 = vld [vmem:[%s0 + $0x70] sm:$0xf]
  %v52 = vld [vmem:[%s0 + $0x74] sm:$0xf]
  %v53 = vld [vmem:[%s0 + $0x78] sm:$0xf]
  %v54 = vld [vmem:[%s0 + $0x7c] sm:$0xf]
  %v55 = vld [vmem:[%s0 + $0x80] sm:$0xf]
  %v56 = vld [vmem:[%s0 + $0x84] sm:$0xf]
  %v57 = vld [vmem:[%s0 + $0x88] sm:$0xf]
  %v58 = vld [vmem:[%s0 + $0x8c] sm:$0xf]
  %v59 = vld [vmem:[%s2] sm:$0xff]
  %v60 = vld [vmem:[%s2 + $0x8] sm:$0xff]
  %v61 = vld [vmem:[%s2 + $0x10] sm:$0xff]
  %v62 = vld [vmem:[%s2 + $0x18] sm:$0xff]
  %64 = vset.pattern.permute.xlu0 0
  %65 = vperm.xlu0 %64, %v59
  %v66 = vpop.permute.xlu0 %65
  %69 = vset.pattern.permute.xlu0 0
  %70 = vperm.xlu0 %69, %v60
  %v71 = vpop.permute.xlu0 %70
  %74 = vset.pattern.permute.xlu0 0
  %75 = vperm.xlu0 %74, %v61
  %v76 = vpop.permute.xlu0 %75
  %79 = vset.pattern.permute.xlu0 0
  %80 = vperm.xlu0 %79, %v62
  %v81 = vpop.permute.xlu0 %80
  %v91 = vunpack.c.l.b16 %v15
  %v92 = vunpack.c.h.b16 %v15
  %v93 = vunpack.c.l.b16 %v16
  %v94 = vunpack.c.l.b16 %v17
  %v95 = vunpack.c.h.b16 %v17
  %v96 = vunpack.c.l.b16 %v18
  %v97 = vunpack.c.l.b16 %v19
  %v98 = vunpack.c.h.b16 %v19
  %v99 = vunpack.c.l.b16 %v20
  %v100 = vunpack.c.l.b16 %v21
  %v101 = vunpack.c.h.b16 %v21
  %v102 = vunpack.c.l.b16 %v22
  %v103 = vpack.c.b16 %v94, %v91
  %v104 = vpack.c.b16 %v95, %v92
  %v105 = vpack.c.b16 %v96, %v93
  %v106 = vpack.c.b16 %v100, %v97
  %v107 = vpack.c.b16 %v101, %v98
  %v108 = vpack.c.b16 %v102, %v99
  %v149 = vunpack.c.l.b16 %v23
  %v150 = vunpack.c.l.b16 %v24
  %v151 = vunpack.c.l.b16 %v25
  %v152 = vunpack.c.l.b16 %v26
  %v153 = vunpack.c.l.b16 %v27
  %v154 = vunpack.c.l.b16 %v28
  %v155 = vunpack.c.l.b16 %v29
  %v156 = vunpack.c.l.b16 %v30
  %v157 = vunpack.c.l.b16 %v31
  %v158 = vunpack.c.l.b16 %v32
  %v159 = vunpack.c.l.b16 %v33
  %v160 = vunpack.c.l.b16 %v34
  %v161 = vunpack.c.l.b16 %v35
  %v162 = vunpack.c.l.b16 %v36
  %v163 = vunpack.c.l.b16 %v37
  %v164 = vunpack.c.l.b16 %v38
  %v165 = vunpack.c.l.b16 %v39
  %v166 = vunpack.c.l.b16 %v40
  %v167 = vunpack.c.l.b16 %v41
  %v168 = vunpack.c.l.b16 %v42
  %v169 = vunpack.c.l.b16 %v43
  %v170 = vunpack.c.l.b16 %v44
  %v171 = vunpack.c.l.b16 %v45
  %v172 = vunpack.c.l.b16 %v46
  %v173 = vunpack.c.l.b16 %v47
  %v174 = vunpack.c.l.b16 %v48
  %v175 = vunpack.c.l.b16 %v49
  %v176 = vunpack.c.l.b16 %v50
  %v177 = vunpack.c.l.b16 %v51
  %v178 = vunpack.c.l.b16 %v52
  %v179 = vunpack.c.l.b16 %v53
  %v180 = vunpack.c.l.b16 %v54
  %v181 = vunpack.c.l.b16 %v55
  %v182 = vunpack.c.l.b16 %v56
  %v183 = vunpack.c.l.b16 %v57
  %v184 = vunpack.c.l.b16 %v58
  %v185 = vpack.c.b16 %v150, %v149
  %v186 = vpack.c.b16 %v152, %v151
  %v187 = vpack.c.b16 %v154, %v153
  %v188 = vpack.c.b16 %v156, %v155
  %v189 = vpack.c.b16 %v158, %v157
  %v190 = vpack.c.b16 %v160, %v159
  %v191 = vpack.c.b16 %v162, %v161
  %v192 = vpack.c.b16 %v164, %v163
  %v193 = vpack.c.b16 %v166, %v165
  %v194 = vpack.c.b16 %v168, %v167
  %v195 = vpack.c.b16 %v170, %v169
  %v196 = vpack.c.b16 %v172, %v171
  %v197 = vpack.c.b16 %v174, %v173
  %v198 = vpack.c.b16 %v176, %v175
  %v199 = vpack.c.b16 %v178, %v177
  %v200 = vpack.c.b16 %v180, %v179
  %v201 = vpack.c.b16 %v182, %v181
  %v202 = vpack.c.b16 %v184, %v183
  %vm221 = vcmask 261120
  %v223 = vsel %vm221, %v105, 0
  %v226 = vsel %vm221, %v108, 0
  %228 = vmatpush.bf16.msra.mxu0 %v192
  %229 = vmatpush.bf16.msra.mxu0 %v191
  %230 = vmatpush.bf16.msra.mxu0 %v190
  %231 = vmatpush.bf16.msra.mxu0 %v189
  %232 = vmatpush.bf16.msra.mxu0 %v188
  %233 = vmatpush.bf16.msra.mxu0 %v187
  %234 = vmatpush.bf16.msra.mxu0 %v186
  %235 = vmatpush.bf16.msra.mxu0 %v185
  %236 = vmatmul.bf16.gmra.mxu0 %v103
  %v237 = vpop.f32.mrf.mxu0
  %v238 = vadd.f32 %v66, %v237
  %v239 = vpop.f32.mrf.mxu0
  %v240 = vadd.f32 %v71, %v239
  %241 = vmatmul.bf16.gmra.mxu0 %v106
  %v242 = vpop.f32.mrf.mxu0
  %v243 = vadd.f32 %v76, %v242
  %v244 = vpop.f32.mrf.mxu0
  %v245 = vadd.f32 %v81, %v244
  %246 = vdwg.mxu0
  %247 = vmatpush.bf16.msra.mxu0 %v200
  %248 = vmatpush.bf16.msra.mxu0 %v199
  %249 = vmatpush.bf16.msra.mxu0 %v198
  %250 = vmatpush.bf16.msra.mxu0 %v197
  %251 = vmatpush.bf16.msra.mxu0 %v196
  %252 = vmatpush.bf16.msra.mxu0 %v195
  %253 = vmatpush.bf16.msra.mxu0 %v194
  %254 = vmatpush.bf16.msra.mxu0 %v193
  %255 = vmatmul.bf16.gmra.mxu0 %v104
  %v256 = vpop.f32.mrf.mxu0
  %v257 = vadd.f32 %v238, %v256
  %v258 = vpop.f32.mrf.mxu0
  %v259 = vadd.f32 %v240, %v258
  %260 = vmatmul.bf16.gmra.mxu0 %v107
  %v261 = vpop.f32.mrf.mxu0
  %v262 = vadd.f32 %v243, %v261
  %v263 = vpop.f32.mrf.mxu0
  %v264 = vadd.f32 %v245, %v263
  %265 = vdwg.mxu0
  %266 = vmatpush.bf16.msra.mxu0 0
  %267 = vmatpush.bf16.msra.mxu0 0
  %268 = vmatpush.bf16.msra.mxu0 0
  %269 = vmatpush.bf16.msra.mxu0 0
  %270 = vmatpush.bf16.msra.mxu0 0
  %271 = vmatpush.bf16.msra.mxu0 0
  %272 = vmatpush.bf16.msra.mxu0 %v202
  %273 = vmatpush.bf16.msra.mxu0 %v201
  %274 = vmatmul.bf16.gmra.mxu0 %v223
  %v275 = vpop.f32.mrf.mxu0
  %v276 = vadd.f32 %v257, %v275
  %v277 = vpop.f32.mrf.mxu0
  %v278 = vadd.f32 %v259, %v277
  %279 = vmatmul.bf16.gmra.mxu0 %v226
  %v280 = vpop.f32.mrf.mxu0
  %v281 = vadd.f32 %v262, %v280
  %v282 = vpop.f32.mrf.mxu0
  %v283 = vadd.f32 %v264, %v282
  %284 = vdwg.mxu0
  %v285 = vlaneseq
  %v286 = vshrl.u32 %v285, 7
  %v287 = vadd.s32 %v286, 8
  %v288 = vadd.s32 %v286, 16
  %v289 = vadd.s32 %v286, 24
  %v290 = vlaneseq
  %v291 = vand.u32 %v290, 127
  %vm292 = vcmp.ge.s32.totalorder %v286, 0
  %vm293 = vcmp.ge.s32.totalorder %v287, 0
  %vm294 = vcmp.ge.s32.totalorder %v288, 0
  %vm295 = vcmp.ge.s32.totalorder %v289, 0
  %vm296 = vcmp.lt.s32.totalorder %v286, 16
  %vm297 = vcmp.lt.s32.totalorder %v287, 16
  %vm298 = vcmp.lt.s32.totalorder %v288, 16
  %vm299 = vcmp.lt.s32.totalorder %v289, 16
  %vm300 = vmand %vm292, %vm296
  %vm301 = vmand %vm293, %vm297
  %vm302 = vmand %vm294, %vm298
  %vm303 = vmand %vm295, %vm299
  %vm304 = vcmp.ge.s32.totalorder %v291, 0
  %vm305 = vmand %vm300, %vm304
  %vm306 = vmand %vm301, %vm304
  %vm307 = vmand %vm302, %vm304
  %vm308 = vmand %vm303, %vm304
  %vm309 = vcmp.lt.s32.totalorder %v291, 64
  %vm310 = vmand %vm305, %vm309
  %vm311 = vmand %vm306, %vm309
  %vm312 = vmand %vm307, %vm309
  %vm313 = vmand %vm308, %vm309
  %v314 = vsel %vm310, %v276, 0.0
  %v315 = vsel %vm311, %v278, 0.0
  %v316 = vsel %vm312, %v281, 0.0
  %v317 = vsel %vm313, %v283, 0.0
  %318 = vadd.xlane.f32.xlu0 %v314
  %v319 = vpop.xlane.xlu0 %318
  %320 = vadd.xlane.f32.xlu0 %v315
  %v321 = vpop.xlane.xlu0 %320
  %322 = vadd.xlane.f32.xlu0 %v316
  %v323 = vpop.xlane.xlu0 %322
  %324 = vadd.xlane.f32.xlu0 %v317
  %v325 = vpop.xlane.xlu0 %324
  %v326 = vadd.f32 %v319, %v321
  %v327 = vadd.f32 %v326, %v323
  %v328 = vadd.f32 %v327, %v325
  %v329 = vrot.slane %v328, 4
  %v330 = vadd.f32 %v328, %v329
  %v331 = vrot.slane %v330, 2
  %v332 = vadd.f32 %v330, %v331
  %v333 = vrot.slane %v332, 1
  %v334 = vadd.f32 %v332, %v333
  %v335 = vmul.f32 %v334, 0.0009765625
  %v336 = vsub.f32 %v276, %v335
  %v337 = vsub.f32 %v278, %v335
  %v338 = vsub.f32 %v281, %v335
  %v339 = vsub.f32 %v283, %v335
  %v340 = vsel %vm310, %v336, 0.0
  %v341 = vsel %vm311, %v337, 0.0
  %v342 = vsel %vm312, %v338, 0.0
  %v343 = vsel %vm313, %v339, 0.0
  %v344 = vmul.f32 %v340, %v340
  %v345 = vmul.f32 %v341, %v341
  %v346 = vmul.f32 %v342, %v342
  %v347 = vmul.f32 %v343, %v343
  %348 = vadd.xlane.f32.xlu0 %v344
  %v349 = vpop.xlane.xlu0 %348
  %350 = vadd.xlane.f32.xlu0 %v345
  %v351 = vpop.xlane.xlu0 %350
  %352 = vadd.xlane.f32.xlu0 %v346
  %v353 = vpop.xlane.xlu0 %352
  %354 = vadd.xlane.f32.xlu0 %v347
  %v355 = vpop.xlane.xlu0 %354
  %v356 = vadd.f32 %v349, %v351
  %v357 = vadd.f32 %v356, %v353
  %v358 = vadd.f32 %v357, %v355
  %v359 = vrot.slane %v358, 4
  %v360 = vadd.f32 %v358, %v359
  %v361 = vrot.slane %v360, 2
  %v362 = vadd.f32 %v360, %v361
  %v363 = vrot.slane %v362, 1
  %v364 = vadd.f32 %v362, %v363
  %v365 = vmul.f32 %v364, 0.0009765625
  %v366 = vadd.f32 %v365, 1e-05
  %v367 = vrsqrt.pop %v366
  %v368 = vmul.f32 %v367, %v366
  %v369 = vmul.f32 %v368, %v367
  %v370 = vmul.f32 0.5, %v369
  %v371 = vsub.f32 1.5, %v370
  %v372 = vmul.f32 %v367, %v371
  %vm373 = vweird.f32 %v366
  %vm374 = vweird.f32 %v367
  %vm375 = vmor %vm373, %vm374
  %v376 = vsel %vm375, %v367, %v372
  %v377 = vmul.f32 %v336, %v376
  %v378 = vmul.f32 %v337, %v376
  %v379 = vmul.f32 %v338, %v376
  %v380 = vmul.f32 %v339, %v376
  %v381 = vsel %vm310, %v377, %v276
  %v382 = vsel %vm311, %v378, %v278
  %v383 = vsel %vm312, %v379, %v281
  %v384 = vsel %vm313, %v380, %v283
  %vm385 = vcmp.ge.s32.totalorder %v291, 64
  %vm386 = vmand %vm300, %vm385
  %vm387 = vmand %vm301, %vm385
  %vm388 = vmand %vm302, %vm385
  %vm389 = vmand %vm303, %vm385
  %vm390 = vcmp.lt.s32.totalorder %v291, 128
  %vm391 = vmand %vm386, %vm390
  %vm392 = vmand %vm387, %vm390
  %vm393 = vmand %vm388, %vm390
  %vm394 = vmand %vm389, %vm390
  %v395 = vsel %vm391, %v276, 0.0
  %v396 = vsel %vm392, %v278, 0.0
  %v397 = vsel %vm393, %v281, 0.0
  %v398 = vsel %vm394, %v283, 0.0
  %399 = vadd.xlane.f32.xlu0 %v395
  %v400 = vpop.xlane.xlu0 %399
  %401 = vadd.xlane.f32.xlu0 %v396
  %v402 = vpop.xlane.xlu0 %401
  %403 = vadd.xlane.f32.xlu0 %v397
  %v404 = vpop.xlane.xlu0 %403
  %405 = vadd.xlane.f32.xlu0 %v398
  %v406 = vpop.xlane.xlu0 %405
  %v407 = vadd.f32 %v400, %v402
  %v408 = vadd.f32 %v407, %v404
  %v409 = vadd.f32 %v408, %v406
  %v410 = vrot.slane %v409, 4
  %v411 = vadd.f32 %v409, %v410
  %v412 = vrot.slane %v411, 2
  %v413 = vadd.f32 %v411, %v412
  %v414 = vrot.slane %v413, 1
  %v415 = vadd.f32 %v413, %v414
  %v416 = vmul.f32 %v415, 0.0009765625
  %v417 = vsub.f32 %v276, %v416
  %v418 = vsub.f32 %v278, %v416
  %v419 = vsub.f32 %v281, %v416
  %v420 = vsub.f32 %v283, %v416
  %v421 = vsel %vm391, %v417, 0.0
  %v422 = vsel %vm392, %v418, 0.0
  %v423 = vsel %vm393, %v419, 0.0
  %v424 = vsel %vm394, %v420, 0.0
  %v425 = vmul.f32 %v421, %v421
  %v426 = vmul.f32 %v422, %v422
  %v427 = vmul.f32 %v423, %v423
  %v428 = vmul.f32 %v424, %v424
  %429 = vadd.xlane.f32.xlu0 %v425
  %v430 = vpop.xlane.xlu0 %429
  %431 = vadd.xlane.f32.xlu0 %v426
  %v432 = vpop.xlane.xlu0 %431
  %433 = vadd.xlane.f32.xlu0 %v427
  %v434 = vpop.xlane.xlu0 %433
  %435 = vadd.xlane.f32.xlu0 %v428
  %v436 = vpop.xlane.xlu0 %435
  %v437 = vadd.f32 %v430, %v432
  %v438 = vadd.f32 %v437, %v434
  %v439 = vadd.f32 %v438, %v436
  %v440 = vrot.slane %v439, 4
  %v441 = vadd.f32 %v439, %v440
  %v442 = vrot.slane %v441, 2
  %v443 = vadd.f32 %v441, %v442
  %v444 = vrot.slane %v443, 1
  %v445 = vadd.f32 %v443, %v444
  %v446 = vmul.f32 %v445, 0.0009765625
  %v447 = vadd.f32 %v446, 1e-05
  %v448 = vrsqrt.pop %v447
  %v449 = vmul.f32 %v448, %v447
  %v450 = vmul.f32 %v449, %v448
  %v451 = vmul.f32 0.5, %v450
  %v452 = vsub.f32 1.5, %v451
  %v453 = vmul.f32 %v448, %v452
  %vm454 = vweird.f32 %v447
  %vm455 = vweird.f32 %v448
  %vm456 = vmor %vm454, %vm455
  %v457 = vsel %vm456, %v448, %v453
  %v458 = vmul.f32 %v417, %v457
  %v459 = vmul.f32 %v418, %v457
  %v460 = vmul.f32 %v419, %v457
  %v461 = vmul.f32 %v420, %v457
  %v462 = vsel %vm391, %v458, %v381
  %v463 = vsel %vm392, %v459, %v382
  %v464 = vsel %vm393, %v460, %v383
  %v465 = vsel %vm394, %v461, %v384
  %vm466 = vcmp.ge.s32.totalorder %v286, 16
  %vm467 = vcmp.ge.s32.totalorder %v287, 16
  %vm468 = vcmp.ge.s32.totalorder %v288, 16
  %vm469 = vcmp.ge.s32.totalorder %v289, 16
  %vm470 = vcmp.lt.s32.totalorder %v286, 32
  %vm471 = vcmp.lt.s32.totalorder %v287, 32
  %vm472 = vcmp.lt.s32.totalorder %v288, 32
  %vm473 = vcmp.lt.s32.totalorder %v289, 32
  %vm474 = vmand %vm466, %vm470
  %vm475 = vmand %vm467, %vm471
  %vm476 = vmand %vm468, %vm472
  %vm477 = vmand %vm469, %vm473
  %vm478 = vmand %vm474, %vm304
  %vm479 = vmand %vm475, %vm304
  %vm480 = vmand %vm476, %vm304
  %vm481 = vmand %vm477, %vm304
  %vm482 = vmand %vm478, %vm309
  %vm483 = vmand %vm479, %vm309
  %vm484 = vmand %vm480, %vm309
  %vm485 = vmand %vm481, %vm309
  %v486 = vsel %vm482, %v276, 0.0
  %v487 = vsel %vm483, %v278, 0.0
  %v488 = vsel %vm484, %v281, 0.0
  %v489 = vsel %vm485, %v283, 0.0
  %490 = vadd.xlane.f32.xlu0 %v486
  %v491 = vpop.xlane.xlu0 %490
  %492 = vadd.xlane.f32.xlu0 %v487
  %v493 = vpop.xlane.xlu0 %492
  %494 = vadd.xlane.f32.xlu0 %v488
  %v495 = vpop.xlane.xlu0 %494
  %496 = vadd.xlane.f32.xlu0 %v489
  %v497 = vpop.xlane.xlu0 %496
  %v498 = vadd.f32 %v491, %v493
  %v499 = vadd.f32 %v498, %v495
  %v500 = vadd.f32 %v499, %v497
  %v501 = vrot.slane %v500, 4
  %v502 = vadd.f32 %v500, %v501
  %v503 = vrot.slane %v502, 2
  %v504 = vadd.f32 %v502, %v503
  %v505 = vrot.slane %v504, 1
  %v506 = vadd.f32 %v504, %v505
  %v507 = vmul.f32 %v506, 0.0009765625
  %v508 = vsub.f32 %v276, %v507
  %v509 = vsub.f32 %v278, %v507
  %v510 = vsub.f32 %v281, %v507
  %v511 = vsub.f32 %v283, %v507
  %v512 = vsel %vm482, %v508, 0.0
  %v513 = vsel %vm483, %v509, 0.0
  %v514 = vsel %vm484, %v510, 0.0
  %v515 = vsel %vm485, %v511, 0.0
  %v516 = vmul.f32 %v512, %v512
  %v517 = vmul.f32 %v513, %v513
  %v518 = vmul.f32 %v514, %v514
  %v519 = vmul.f32 %v515, %v515
  %520 = vadd.xlane.f32.xlu0 %v516
  %v521 = vpop.xlane.xlu0 %520
  %522 = vadd.xlane.f32.xlu0 %v517
  %v523 = vpop.xlane.xlu0 %522
  %524 = vadd.xlane.f32.xlu0 %v518
  %v525 = vpop.xlane.xlu0 %524
  %526 = vadd.xlane.f32.xlu0 %v519
  %v527 = vpop.xlane.xlu0 %526
  %v528 = vadd.f32 %v521, %v523
  %v529 = vadd.f32 %v528, %v525
  %v530 = vadd.f32 %v529, %v527
  %v531 = vrot.slane %v530, 4
  %v532 = vadd.f32 %v530, %v531
  %v533 = vrot.slane %v532, 2
  %v534 = vadd.f32 %v532, %v533
  %v535 = vrot.slane %v534, 1
  %v536 = vadd.f32 %v534, %v535
  %v537 = vmul.f32 %v536, 0.0009765625
  %v538 = vadd.f32 %v537, 1e-05
  %v539 = vrsqrt.pop %v538
  %v540 = vmul.f32 %v539, %v538
  %v541 = vmul.f32 %v540, %v539
  %v542 = vmul.f32 0.5, %v541
  %v543 = vsub.f32 1.5, %v542
  %v544 = vmul.f32 %v539, %v543
  %vm545 = vweird.f32 %v538
  %vm546 = vweird.f32 %v539
  %vm547 = vmor %vm545, %vm546
  %v548 = vsel %vm547, %v539, %v544
  %v549 = vmul.f32 %v508, %v548
  %v550 = vmul.f32 %v509, %v548
  %v551 = vmul.f32 %v510, %v548
  %v552 = vmul.f32 %v511, %v548
  %v553 = vsel %vm482, %v549, %v462
  %v554 = vsel %vm483, %v550, %v463
  %v555 = vsel %vm484, %v551, %v464
  %v556 = vsel %vm485, %v552, %v465
  %vm557 = vmand %vm474, %vm385
  %vm558 = vmand %vm475, %vm385
  %vm559 = vmand %vm476, %vm385
  %vm560 = vmand %vm477, %vm385
  %vm561 = vmand %vm557, %vm390
  %vm562 = vmand %vm558, %vm390
  %vm563 = vmand %vm559, %vm390
  %vm564 = vmand %vm560, %vm390
  %v565 = vsel %vm561, %v276, 0.0
  %v566 = vsel %vm562, %v278, 0.0
  %v567 = vsel %vm563, %v281, 0.0
  %v568 = vsel %vm564, %v283, 0.0
  %569 = vadd.xlane.f32.xlu0 %v565
  %v570 = vpop.xlane.xlu0 %569
  %571 = vadd.xlane.f32.xlu0 %v566
  %v572 = vpop.xlane.xlu0 %571
  %573 = vadd.xlane.f32.xlu0 %v567
  %v574 = vpop.xlane.xlu0 %573
  %575 = vadd.xlane.f32.xlu0 %v568
  %v576 = vpop.xlane.xlu0 %575
  %v577 = vadd.f32 %v570, %v572
  %v578 = vadd.f32 %v577, %v574
  %v579 = vadd.f32 %v578, %v576
  %v580 = vrot.slane %v579, 4
  %v581 = vadd.f32 %v579, %v580
  %v582 = vrot.slane %v581, 2
  %v583 = vadd.f32 %v581, %v582
  %v584 = vrot.slane %v583, 1
  %v585 = vadd.f32 %v583, %v584
  %v586 = vmul.f32 %v585, 0.0009765625
  %v587 = vsub.f32 %v276, %v586
  %v588 = vsub.f32 %v278, %v586
  %v589 = vsub.f32 %v281, %v586
  %v590 = vsub.f32 %v283, %v586
  %v591 = vsel %vm561, %v587, 0.0
  %v592 = vsel %vm562, %v588, 0.0
  %v593 = vsel %vm563, %v589, 0.0
  %v594 = vsel %vm564, %v590, 0.0
  %v595 = vmul.f32 %v591, %v591
  %v596 = vmul.f32 %v592, %v592
  %v597 = vmul.f32 %v593, %v593
  %v598 = vmul.f32 %v594, %v594
  %599 = vadd.xlane.f32.xlu0 %v595
  %v600 = vpop.xlane.xlu0 %599
  %601 = vadd.xlane.f32.xlu0 %v596
  %v602 = vpop.xlane.xlu0 %601
  %603 = vadd.xlane.f32.xlu0 %v597
  %v604 = vpop.xlane.xlu0 %603
  %605 = vadd.xlane.f32.xlu0 %v598
  %v606 = vpop.xlane.xlu0 %605
  %v607 = vadd.f32 %v600, %v602
  %v608 = vadd.f32 %v607, %v604
  %v609 = vadd.f32 %v608, %v606
  %v610 = vrot.slane %v609, 4
  %v611 = vadd.f32 %v609, %v610
  %v612 = vrot.slane %v611, 2
  %v613 = vadd.f32 %v611, %v612
  %v614 = vrot.slane %v613, 1
  %v615 = vadd.f32 %v613, %v614
  %v616 = vmul.f32 %v615, 0.0009765625
  %v617 = vadd.f32 %v616, 1e-05
  %v618 = vrsqrt.pop %v617
  %v619 = vmul.f32 %v618, %v617
  %v620 = vmul.f32 %v619, %v618
  %v621 = vmul.f32 0.5, %v620
  %v622 = vsub.f32 1.5, %v621
  %v623 = vmul.f32 %v618, %v622
  %vm624 = vweird.f32 %v617
  %vm625 = vweird.f32 %v618
  %vm626 = vmor %vm624, %vm625
  %v627 = vsel %vm626, %v618, %v623
  %v628 = vmul.f32 %v587, %v627
  %v629 = vmul.f32 %v588, %v627
  %v630 = vmul.f32 %v589, %v627
  %v631 = vmul.f32 %v590, %v627
  %v632 = vsel %vm561, %v628, %v553
  %v633 = vsel %vm562, %v629, %v554
  %v634 = vsel %vm563, %v630, %v555
  %v635 = vsel %vm564, %v631, %v556
  %636 = vset.pattern.permute.xlu0 1
  %637 = vperm.xlu0 %636, %v59
  %v638 = vpop.permute.xlu0 %637
  %640 = vset.pattern.permute.xlu0 1
  %641 = vperm.xlu0 %640, %v60
  %v642 = vpop.permute.xlu0 %641
  %644 = vset.pattern.permute.xlu0 1
  %645 = vperm.xlu0 %644, %v61
  %v646 = vpop.permute.xlu0 %645
  %648 = vset.pattern.permute.xlu0 1
  %649 = vperm.xlu0 %648, %v62
  %v650 = vpop.permute.xlu0 %649
  %v652 = vmul.f32 %v632, %v638
  %v653 = vmul.f32 %v633, %v642
  %v654 = vmul.f32 %v634, %v646
  %v655 = vmul.f32 %v635, %v650
  %656 = vset.pattern.permute.xlu0 2
  %657 = vperm.xlu0 %656, %v59
  %v658 = vpop.permute.xlu0 %657
  %660 = vset.pattern.permute.xlu0 2
  %661 = vperm.xlu0 %660, %v60
  %v662 = vpop.permute.xlu0 %661
  %664 = vset.pattern.permute.xlu0 2
  %665 = vperm.xlu0 %664, %v61
  %v666 = vpop.permute.xlu0 %665
  %668 = vset.pattern.permute.xlu0 2
  %669 = vperm.xlu0 %668, %v62
  %v670 = vpop.permute.xlu0 %669
  %v672 = vadd.f32 %v652, %v658
  %v673 = vadd.f32 %v653, %v662
  %v674 = vadd.f32 %v654, %v666
  %v675 = vadd.f32 %v655, %v670
  %vm676 = vcmp.gt.f32.partialorder %v672, 0.0
  %vm677 = vcmp.gt.f32.partialorder %v673, 0.0
  %vm678 = vcmp.gt.f32.partialorder %v674, 0.0
  %vm679 = vcmp.gt.f32.partialorder %v675, 0.0
  %v680 = vmul.f32 %v672, 0.2
  %v681 = vmul.f32 %v673, 0.2
  %v682 = vmul.f32 %v674, 0.2
  %v683 = vmul.f32 %v675, 0.2
  %v684 = vsel %vm676, %v672, %v680
  %v685 = vsel %vm677, %v673, %v681
  %v686 = vsel %vm678, %v674, %v682
  %v687 = vsel %vm679, %v675, %v683
  %v688 = vpack.c.bf16 %v684, %v684
  %v689 = vpack.c.bf16 %v685, %v685
  %v690 = vpack.c.bf16 %v686, %v686
  %v691 = vpack.c.bf16 %v687, %v687
  %692 = vst [vmem:[%s3] sm:$0xf] %v688
  %693 = vst [vmem:[%s3 + $0x4] sm:$0xf] %v689
  %694 = vst [vmem:[%s3 + $0x8] sm:$0xf] %v690
  %695 = vst [vmem:[%s3 + $0xc] sm:$0xf] %v691
  // Predicated region
  $region14: #{_lambda_.4} parent=0 // pred_check
    _
  $region15: #{_lambda_.4} parent=0 // pred_check_branch
    %697 = sbr.rel (0) target = $region17
  $region16: #{_lambda_.4} parent=0 // pred_region
    _
  $region17: #{_lambda_.4} parent=0 // pred_fallthru
    _
  // Predicated region
  $region18: #{_lambda_.4} parent=0 // pred_check
    _
  $region19: #{_lambda_.4} parent=0 // pred_check_branch
    %699 = sbr.rel (0) target = $region21
  $region20: #{_lambda_.4} parent=0 // pred_region
    _
  $region21: #{_lambda_.4} parent=0 // pred_fallthru
    _

// kernel: _lambda_.5
$region0: #{_lambda_.5}
  #allocation0 [shape = 'u32[]', space=smem, size = 0x4, offset = 0x4, fixed_abs, tag = 'smem constant byte address 0x4 - core index']
  #allocation1 [shape = 'u32[72,128]{1,0:T(1,128)}', space=vmem, size = 0x9000, scoped, tag = 'internal scratch']
  %s0 = inlined_call_operand.vmem [shape: bf16[288,128], index: 0, kind: input, shape index: {}]
  %s1 = inlined_call_operand.vmem [shape: bf16[32,288], index: 1, kind: input, shape index: {}]
  %s2 = inlined_call_operand.vmem [shape: f32[32,3], index: 2, kind: input, shape index: {}]
  %s3 = inlined_call_operand.vmem [shape: f32[32,128], index: 3, kind: output, shape index: {}]
  %s4 = sld [smem:[#allocation0]]
  $region22: #{_lambda_.5} parent=0
    _
  %s6 = ssub.s32 1, %s4
  %s7 = scalar_select 0, %s6, %s4
  // Predicated region
  $region2: #{_lambda_.5} parent=0 // pred_check
    _
  $region3: #{_lambda_.5} parent=0 // pred_check_branch
    %9 = sbr.rel (0) target = $region5
  $region4: #{_lambda_.5} parent=0 // pred_region
    _
  $region5: #{_lambda_.5} parent=0 // pred_fallthru
    _
  // Predicated region
  $region6: #{_lambda_.5} parent=0 // pred_check
    _
  $region7: #{_lambda_.5} parent=0 // pred_check_branch
    %11 = sbr.rel (0) target = $region9
  $region8: #{_lambda_.5} parent=0 // pred_region
    _
  $region9: #{_lambda_.5} parent=0 // pred_fallthru
    _
  // Predicated region
  $region10: #{_lambda_.5} parent=0 // pred_check
    _
  $region11: #{_lambda_.5} parent=0 // pred_check_branch
    %13 = sbr.rel (0) target = $region13
  $region12: #{_lambda_.5} parent=0 // pred_region
    _
  $region13: #{_lambda_.5} parent=0 // pred_fallthru
    _
  %v15 = vld [vmem:[%s1] sm:$0xff]
  %v16 = vld [vmem:[%s1 + $0x8] sm:$0xf]
  %v17 = vld [vmem:[%s1 + $0xc] sm:$0xff]
  %v18 = vld [vmem:[%s1 + $0x14] sm:$0xf]
  %v19 = vld [vmem:[%s1 + $0x18] sm:$0xff]
  %v20 = vld [vmem:[%s1 + $0x20] sm:$0xf]
  %v21 = vld [vmem:[%s1 + $0x24] sm:$0xff]
  %v22 = vld [vmem:[%s1 + $0x2c] sm:$0xf]
  %v23 = vld [vmem:[%s0] sm:$0xf]
  %v24 = vld [vmem:[%s0 + $0x4] sm:$0xf]
  %v25 = vld [vmem:[%s0 + $0x8] sm:$0xf]
  %v26 = vld [vmem:[%s0 + $0xc] sm:$0xf]
  %v27 = vld [vmem:[%s0 + $0x10] sm:$0xf]
  %v28 = vld [vmem:[%s0 + $0x14] sm:$0xf]
  %v29 = vld [vmem:[%s0 + $0x18] sm:$0xf]
  %v30 = vld [vmem:[%s0 + $0x1c] sm:$0xf]
  %v31 = vld [vmem:[%s0 + $0x20] sm:$0xf]
  %v32 = vld [vmem:[%s0 + $0x24] sm:$0xf]
  %v33 = vld [vmem:[%s0 + $0x28] sm:$0xf]
  %v34 = vld [vmem:[%s0 + $0x2c] sm:$0xf]
  %v35 = vld [vmem:[%s0 + $0x30] sm:$0xf]
  %v36 = vld [vmem:[%s0 + $0x34] sm:$0xf]
  %v37 = vld [vmem:[%s0 + $0x38] sm:$0xf]
  %v38 = vld [vmem:[%s0 + $0x3c] sm:$0xf]
  %v39 = vld [vmem:[%s0 + $0x40] sm:$0xf]
  %v40 = vld [vmem:[%s0 + $0x44] sm:$0xf]
  %v41 = vld [vmem:[%s0 + $0x48] sm:$0xf]
  %v42 = vld [vmem:[%s0 + $0x4c] sm:$0xf]
  %v43 = vld [vmem:[%s0 + $0x50] sm:$0xf]
  %v44 = vld [vmem:[%s0 + $0x54] sm:$0xf]
  %v45 = vld [vmem:[%s0 + $0x58] sm:$0xf]
  %v46 = vld [vmem:[%s0 + $0x5c] sm:$0xf]
  %v47 = vld [vmem:[%s0 + $0x60] sm:$0xf]
  %v48 = vld [vmem:[%s0 + $0x64] sm:$0xf]
  %v49 = vld [vmem:[%s0 + $0x68] sm:$0xf]
  %v50 = vld [vmem:[%s0 + $0x6c] sm:$0xf]
  %v51 = vld [vmem:[%s0 + $0x70] sm:$0xf]
  %v52 = vld [vmem:[%s0 + $0x74] sm:$0xf]
  %v53 = vld [vmem:[%s0 + $0x78] sm:$0xf]
  %v54 = vld [vmem:[%s0 + $0x7c] sm:$0xf]
  %v55 = vld [vmem:[%s0 + $0x80] sm:$0xf]
  %v56 = vld [vmem:[%s0 + $0x84] sm:$0xf]
  %v57 = vld [vmem:[%s0 + $0x88] sm:$0xf]
  %v58 = vld [vmem:[%s0 + $0x8c] sm:$0xf]
  %v59 = vld [vmem:[%s2] sm:$0xff]
  %v60 = vld [vmem:[%s2 + $0x8] sm:$0xff]
  %v61 = vld [vmem:[%s2 + $0x10] sm:$0xff]
  %v62 = vld [vmem:[%s2 + $0x18] sm:$0xff]
  %64 = vset.pattern.permute.xlu0 0
  %65 = vperm.xlu0 %64, %v59
  %v66 = vpop.permute.xlu0 %65
  %69 = vset.pattern.permute.xlu0 0
  %70 = vperm.xlu0 %69, %v60
  %v71 = vpop.permute.xlu0 %70
  %74 = vset.pattern.permute.xlu0 0
  %75 = vperm.xlu0 %74, %v61
  %v76 = vpop.permute.xlu0 %75
  %79 = vset.pattern.permute.xlu0 0
  %80 = vperm.xlu0 %79, %v62
  %v81 = vpop.permute.xlu0 %80
  %v91 = vunpack.c.l.b16 %v15
  %v92 = vunpack.c.h.b16 %v15
  %v93 = vunpack.c.l.b16 %v16
  %v94 = vunpack.c.l.b16 %v17
  %v95 = vunpack.c.h.b16 %v17
  %v96 = vunpack.c.l.b16 %v18
  %v97 = vunpack.c.l.b16 %v19
  %v98 = vunpack.c.h.b16 %v19
  %v99 = vunpack.c.l.b16 %v20
  %v100 = vunpack.c.l.b16 %v21
  %v101 = vunpack.c.h.b16 %v21
  %v102 = vunpack.c.l.b16 %v22
  %v103 = vpack.c.b16 %v94, %v91
  %v104 = vpack.c.b16 %v95, %v92
  %v105 = vpack.c.b16 %v96, %v93
  %v106 = vpack.c.b16 %v100, %v97
  %v107 = vpack.c.b16 %v101, %v98
  %v108 = vpack.c.b16 %v102, %v99
  %v149 = vunpack.c.l.b16 %v23
  %v150 = vunpack.c.l.b16 %v24
  %v151 = vunpack.c.l.b16 %v25
  %v152 = vunpack.c.l.b16 %v26
  %v153 = vunpack.c.l.b16 %v27
  %v154 = vunpack.c.l.b16 %v28
  %v155 = vunpack.c.l.b16 %v29
  %v156 = vunpack.c.l.b16 %v30
  %v157 = vunpack.c.l.b16 %v31
  %v158 = vunpack.c.l.b16 %v32
  %v159 = vunpack.c.l.b16 %v33
  %v160 = vunpack.c.l.b16 %v34
  %v161 = vunpack.c.l.b16 %v35
  %v162 = vunpack.c.l.b16 %v36
  %v163 = vunpack.c.l.b16 %v37
  %v164 = vunpack.c.l.b16 %v38
  %v165 = vunpack.c.l.b16 %v39
  %v166 = vunpack.c.l.b16 %v40
  %v167 = vunpack.c.l.b16 %v41
  %v168 = vunpack.c.l.b16 %v42
  %v169 = vunpack.c.l.b16 %v43
  %v170 = vunpack.c.l.b16 %v44
  %v171 = vunpack.c.l.b16 %v45
  %v172 = vunpack.c.l.b16 %v46
  %v173 = vunpack.c.l.b16 %v47
  %v174 = vunpack.c.l.b16 %v48
  %v175 = vunpack.c.l.b16 %v49
  %v176 = vunpack.c.l.b16 %v50
  %v177 = vunpack.c.l.b16 %v51
  %v178 = vunpack.c.l.b16 %v52
  %v179 = vunpack.c.l.b16 %v53
  %v180 = vunpack.c.l.b16 %v54
  %v181 = vunpack.c.l.b16 %v55
  %v182 = vunpack.c.l.b16 %v56
  %v183 = vunpack.c.l.b16 %v57
  %v184 = vunpack.c.l.b16 %v58
  %v185 = vpack.c.b16 %v150, %v149
  %v186 = vpack.c.b16 %v152, %v151
  %v187 = vpack.c.b16 %v154, %v153
  %v188 = vpack.c.b16 %v156, %v155
  %v189 = vpack.c.b16 %v158, %v157
  %v190 = vpack.c.b16 %v160, %v159
  %v191 = vpack.c.b16 %v162, %v161
  %v192 = vpack.c.b16 %v164, %v163
  %v193 = vpack.c.b16 %v166, %v165
  %v194 = vpack.c.b16 %v168, %v167
  %v195 = vpack.c.b16 %v170, %v169
  %v196 = vpack.c.b16 %v172, %v171
  %v197 = vpack.c.b16 %v174, %v173
  %v198 = vpack.c.b16 %v176, %v175
  %v199 = vpack.c.b16 %v178, %v177
  %v200 = vpack.c.b16 %v180, %v179
  %v201 = vpack.c.b16 %v182, %v181
  %v202 = vpack.c.b16 %v184, %v183
  %vm221 = vcmask 261120
  %v223 = vsel %vm221, %v105, 0
  %v226 = vsel %vm221, %v108, 0
  %228 = vmatpush.bf16.msra.mxu0 %v192
  %229 = vmatpush.bf16.msra.mxu0 %v191
  %230 = vmatpush.bf16.msra.mxu0 %v190
  %231 = vmatpush.bf16.msra.mxu0 %v189
  %232 = vmatpush.bf16.msra.mxu0 %v188
  %233 = vmatpush.bf16.msra.mxu0 %v187
  %234 = vmatpush.bf16.msra.mxu0 %v186
  %235 = vmatpush.bf16.msra.mxu0 %v185
  %236 = vmatmul.bf16.gmra.mxu0 %v103
  %v237 = vpop.f32.mrf.mxu0
  %v238 = vadd.f32 %v66, %v237
  %v239 = vpop.f32.mrf.mxu0
  %v240 = vadd.f32 %v71, %v239
  %241 = vmatmul.bf16.gmra.mxu0 %v106
  %v242 = vpop.f32.mrf.mxu0
  %v243 = vadd.f32 %v76, %v242
  %v244 = vpop.f32.mrf.mxu0
  %v245 = vadd.f32 %v81, %v244
  %246 = vdwg.mxu0
  %247 = vmatpush.bf16.msra.mxu0 %v200
  %248 = vmatpush.bf16.msra.mxu0 %v199
  %249 = vmatpush.bf16.msra.mxu0 %v198
  %250 = vmatpush.bf16.msra.mxu0 %v197
  %251 = vmatpush.bf16.msra.mxu0 %v196
  %252 = vmatpush.bf16.msra.mxu0 %v195
  %253 = vmatpush.bf16.msra.mxu0 %v194
  %254 = vmatpush.bf16.msra.mxu0 %v193
  %255 = vmatmul.bf16.gmra.mxu0 %v104
  %v256 = vpop.f32.mrf.mxu0
  %v257 = vadd.f32 %v238, %v256
  %v258 = vpop.f32.mrf.mxu0
  %v259 = vadd.f32 %v240, %v258
  %260 = vmatmul.bf16.gmra.mxu0 %v107
  %v261 = vpop.f32.mrf.mxu0
  %v262 = vadd.f32 %v243, %v261
  %v263 = vpop.f32.mrf.mxu0
  %v264 = vadd.f32 %v245, %v263
  %265 = vdwg.mxu0
  %266 = vmatpush.bf16.msra.mxu0 0
  %267 = vmatpush.bf16.msra.mxu0 0
  %268 = vmatpush.bf16.msra.mxu0 0
  %269 = vmatpush.bf16.msra.mxu0 0
  %270 = vmatpush.bf16.msra.mxu0 0
  %271 = vmatpush.bf16.msra.mxu0 0
  %272 = vmatpush.bf16.msra.mxu0 %v202
  %273 = vmatpush.bf16.msra.mxu0 %v201
  %274 = vmatmul.bf16.gmra.mxu0 %v223
  %v275 = vpop.f32.mrf.mxu0
  %v276 = vadd.f32 %v257, %v275
  %v277 = vpop.f32.mrf.mxu0
  %v278 = vadd.f32 %v259, %v277
  %279 = vmatmul.bf16.gmra.mxu0 %v226
  %v280 = vpop.f32.mrf.mxu0
  %v281 = vadd.f32 %v262, %v280
  %v282 = vpop.f32.mrf.mxu0
  %v283 = vadd.f32 %v264, %v282
  %284 = vdwg.mxu0
  %v285 = vlaneseq
  %v286 = vshrl.u32 %v285, 7
  %v287 = vadd.s32 %v286, 8
  %v288 = vadd.s32 %v286, 16
  %v289 = vadd.s32 %v286, 24
  %v290 = vlaneseq
  %v291 = vand.u32 %v290, 127
  %vm292 = vcmp.ge.s32.totalorder %v286, 0
  %vm293 = vcmp.ge.s32.totalorder %v287, 0
  %vm294 = vcmp.ge.s32.totalorder %v288, 0
  %vm295 = vcmp.ge.s32.totalorder %v289, 0
  %vm296 = vcmp.lt.s32.totalorder %v286, 16
  %vm297 = vcmp.lt.s32.totalorder %v287, 16
  %vm298 = vcmp.lt.s32.totalorder %v288, 16
  %vm299 = vcmp.lt.s32.totalorder %v289, 16
  %vm300 = vmand %vm292, %vm296
  %vm301 = vmand %vm293, %vm297
  %vm302 = vmand %vm294, %vm298
  %vm303 = vmand %vm295, %vm299
  %vm304 = vcmp.ge.s32.totalorder %v291, 0
  %vm305 = vmand %vm300, %vm304
  %vm306 = vmand %vm301, %vm304
  %vm307 = vmand %vm302, %vm304
  %vm308 = vmand %vm303, %vm304
  %vm309 = vcmp.lt.s32.totalorder %v291, 64
  %vm310 = vmand %vm305, %vm309
  %vm311 = vmand %vm306, %vm309
  %vm312 = vmand %vm307, %vm309
  %vm313 = vmand %vm308, %vm309
  %v314 = vsel %vm310, %v276, 0.0
  %v315 = vsel %vm311, %v278, 0.0
  %v316 = vsel %vm312, %v281, 0.0
  %v317 = vsel %vm313, %v283, 0.0
  %318 = vadd.xlane.f32.xlu0 %v314
  %v319 = vpop.xlane.xlu0 %318
  %320 = vadd.xlane.f32.xlu0 %v315
  %v321 = vpop.xlane.xlu0 %320
  %322 = vadd.xlane.f32.xlu0 %v316
  %v323 = vpop.xlane.xlu0 %322
  %324 = vadd.xlane.f32.xlu0 %v317
  %v325 = vpop.xlane.xlu0 %324
  %v326 = vadd.f32 %v319, %v321
  %v327 = vadd.f32 %v326, %v323
  %v328 = vadd.f32 %v327, %v325
  %v329 = vrot.slane %v328, 4
  %v330 = vadd.f32 %v328, %v329
  %v331 = vrot.slane %v330, 2
  %v332 = vadd.f32 %v330, %v331
  %v333 = vrot.slane %v332, 1
  %v334 = vadd.f32 %v332, %v333
  %v335 = vmul.f32 %v334, 0.0009765625
  %v336 = vsub.f32 %v276, %v335
  %v337 = vsub.f32 %v278, %v335
  %v338 = vsub.f32 %v281, %v335
  %v339 = vsub.f32 %v283, %v335
  %v340 = vsel %vm310, %v336, 0.0
  %v341 = vsel %vm311, %v337, 0.0
  %v342 = vsel %vm312, %v338, 0.0
  %v343 = vsel %vm313, %v339, 0.0
  %v344 = vmul.f32 %v340, %v340
  %v345 = vmul.f32 %v341, %v341
  %v346 = vmul.f32 %v342, %v342
  %v347 = vmul.f32 %v343, %v343
  %348 = vadd.xlane.f32.xlu0 %v344
  %v349 = vpop.xlane.xlu0 %348
  %350 = vadd.xlane.f32.xlu0 %v345
  %v351 = vpop.xlane.xlu0 %350
  %352 = vadd.xlane.f32.xlu0 %v346
  %v353 = vpop.xlane.xlu0 %352
  %354 = vadd.xlane.f32.xlu0 %v347
  %v355 = vpop.xlane.xlu0 %354
  %v356 = vadd.f32 %v349, %v351
  %v357 = vadd.f32 %v356, %v353
  %v358 = vadd.f32 %v357, %v355
  %v359 = vrot.slane %v358, 4
  %v360 = vadd.f32 %v358, %v359
  %v361 = vrot.slane %v360, 2
  %v362 = vadd.f32 %v360, %v361
  %v363 = vrot.slane %v362, 1
  %v364 = vadd.f32 %v362, %v363
  %v365 = vmul.f32 %v364, 0.0009765625
  %v366 = vadd.f32 %v365, 1e-05
  %v367 = vrsqrt.pop %v366
  %v368 = vmul.f32 %v367, %v366
  %v369 = vmul.f32 %v368, %v367
  %v370 = vmul.f32 0.5, %v369
  %v371 = vsub.f32 1.5, %v370
  %v372 = vmul.f32 %v367, %v371
  %vm373 = vweird.f32 %v366
  %vm374 = vweird.f32 %v367
  %vm375 = vmor %vm373, %vm374
  %v376 = vsel %vm375, %v367, %v372
  %v377 = vmul.f32 %v336, %v376
  %v378 = vmul.f32 %v337, %v376
  %v379 = vmul.f32 %v338, %v376
  %v380 = vmul.f32 %v339, %v376
  %v381 = vsel %vm310, %v377, %v276
  %v382 = vsel %vm311, %v378, %v278
  %v383 = vsel %vm312, %v379, %v281
  %v384 = vsel %vm313, %v380, %v283
  %vm385 = vcmp.ge.s32.totalorder %v291, 64
  %vm386 = vmand %vm300, %vm385
  %vm387 = vmand %vm301, %vm385
  %vm388 = vmand %vm302, %vm385
  %vm389 = vmand %vm303, %vm385
  %vm390 = vcmp.lt.s32.totalorder %v291, 128
  %vm391 = vmand %vm386, %vm390
  %vm392 = vmand %vm387, %vm390
  %vm393 = vmand %vm388, %vm390
  %vm394 = vmand %vm389, %vm390
  %v395 = vsel %vm391, %v276, 0.0
  %v396 = vsel %vm392, %v278, 0.0
  %v397 = vsel %vm393, %v281, 0.0
  %v398 = vsel %vm394, %v283, 0.0
  %399 = vadd.xlane.f32.xlu0 %v395
  %v400 = vpop.xlane.xlu0 %399
  %401 = vadd.xlane.f32.xlu0 %v396
  %v402 = vpop.xlane.xlu0 %401
  %403 = vadd.xlane.f32.xlu0 %v397
  %v404 = vpop.xlane.xlu0 %403
  %405 = vadd.xlane.f32.xlu0 %v398
  %v406 = vpop.xlane.xlu0 %405
  %v407 = vadd.f32 %v400, %v402
  %v408 = vadd.f32 %v407, %v404
  %v409 = vadd.f32 %v408, %v406
  %v410 = vrot.slane %v409, 4
  %v411 = vadd.f32 %v409, %v410
  %v412 = vrot.slane %v411, 2
  %v413 = vadd.f32 %v411, %v412
  %v414 = vrot.slane %v413, 1
  %v415 = vadd.f32 %v413, %v414
  %v416 = vmul.f32 %v415, 0.0009765625
  %v417 = vsub.f32 %v276, %v416
  %v418 = vsub.f32 %v278, %v416
  %v419 = vsub.f32 %v281, %v416
  %v420 = vsub.f32 %v283, %v416
  %v421 = vsel %vm391, %v417, 0.0
  %v422 = vsel %vm392, %v418, 0.0
  %v423 = vsel %vm393, %v419, 0.0
  %v424 = vsel %vm394, %v420, 0.0
  %v425 = vmul.f32 %v421, %v421
  %v426 = vmul.f32 %v422, %v422
  %v427 = vmul.f32 %v423, %v423
  %v428 = vmul.f32 %v424, %v424
  %429 = vadd.xlane.f32.xlu0 %v425
  %v430 = vpop.xlane.xlu0 %429
  %431 = vadd.xlane.f32.xlu0 %v426
  %v432 = vpop.xlane.xlu0 %431
  %433 = vadd.xlane.f32.xlu0 %v427
  %v434 = vpop.xlane.xlu0 %433
  %435 = vadd.xlane.f32.xlu0 %v428
  %v436 = vpop.xlane.xlu0 %435
  %v437 = vadd.f32 %v430, %v432
  %v438 = vadd.f32 %v437, %v434
  %v439 = vadd.f32 %v438, %v436
  %v440 = vrot.slane %v439, 4
  %v441 = vadd.f32 %v439, %v440
  %v442 = vrot.slane %v441, 2
  %v443 = vadd.f32 %v441, %v442
  %v444 = vrot.slane %v443, 1
  %v445 = vadd.f32 %v443, %v444
  %v446 = vmul.f32 %v445, 0.0009765625
  %v447 = vadd.f32 %v446, 1e-05
  %v448 = vrsqrt.pop %v447
  %v449 = vmul.f32 %v448, %v447
  %v450 = vmul.f32 %v449, %v448
  %v451 = vmul.f32 0.5, %v450
  %v452 = vsub.f32 1.5, %v451
  %v453 = vmul.f32 %v448, %v452
  %vm454 = vweird.f32 %v447
  %vm455 = vweird.f32 %v448
  %vm456 = vmor %vm454, %vm455
  %v457 = vsel %vm456, %v448, %v453
  %v458 = vmul.f32 %v417, %v457
  %v459 = vmul.f32 %v418, %v457
  %v460 = vmul.f32 %v419, %v457
  %v461 = vmul.f32 %v420, %v457
  %v462 = vsel %vm391, %v458, %v381
  %v463 = vsel %vm392, %v459, %v382
  %v464 = vsel %vm393, %v460, %v383
  %v465 = vsel %vm394, %v461, %v384
  %vm466 = vcmp.ge.s32.totalorder %v286, 16
  %vm467 = vcmp.ge.s32.totalorder %v287, 16
  %vm468 = vcmp.ge.s32.totalorder %v288, 16
  %vm469 = vcmp.ge.s32.totalorder %v289, 16
  %vm470 = vcmp.lt.s32.totalorder %v286, 32
  %vm471 = vcmp.lt.s32.totalorder %v287, 32
  %vm472 = vcmp.lt.s32.totalorder %v288, 32
  %vm473 = vcmp.lt.s32.totalorder %v289, 32
  %vm474 = vmand %vm466, %vm470
  %vm475 = vmand %vm467, %vm471
  %vm476 = vmand %vm468, %vm472
  %vm477 = vmand %vm469, %vm473
  %vm478 = vmand %vm474, %vm304
  %vm479 = vmand %vm475, %vm304
  %vm480 = vmand %vm476, %vm304
  %vm481 = vmand %vm477, %vm304
  %vm482 = vmand %vm478, %vm309
  %vm483 = vmand %vm479, %vm309
  %vm484 = vmand %vm480, %vm309
  %vm485 = vmand %vm481, %vm309
  %v486 = vsel %vm482, %v276, 0.0
  %v487 = vsel %vm483, %v278, 0.0
  %v488 = vsel %vm484, %v281, 0.0
  %v489 = vsel %vm485, %v283, 0.0
  %490 = vadd.xlane.f32.xlu0 %v486
  %v491 = vpop.xlane.xlu0 %490
  %492 = vadd.xlane.f32.xlu0 %v487
  %v493 = vpop.xlane.xlu0 %492
  %494 = vadd.xlane.f32.xlu0 %v488
  %v495 = vpop.xlane.xlu0 %494
  %496 = vadd.xlane.f32.xlu0 %v489
  %v497 = vpop.xlane.xlu0 %496
  %v498 = vadd.f32 %v491, %v493
  %v499 = vadd.f32 %v498, %v495
  %v500 = vadd.f32 %v499, %v497
  %v501 = vrot.slane %v500, 4
  %v502 = vadd.f32 %v500, %v501
  %v503 = vrot.slane %v502, 2
  %v504 = vadd.f32 %v502, %v503
  %v505 = vrot.slane %v504, 1
  %v506 = vadd.f32 %v504, %v505
  %v507 = vmul.f32 %v506, 0.0009765625
  %v508 = vsub.f32 %v276, %v507
  %v509 = vsub.f32 %v278, %v507
  %v510 = vsub.f32 %v281, %v507
  %v511 = vsub.f32 %v283, %v507
  %v512 = vsel %vm482, %v508, 0.0
  %v513 = vsel %vm483, %v509, 0.0
  %v514 = vsel %vm484, %v510, 0.0
  %v515 = vsel %vm485, %v511, 0.0
  %v516 = vmul.f32 %v512, %v512
  %v517 = vmul.f32 %v513, %v513
  %v518 = vmul.f32 %v514, %v514
  %v519 = vmul.f32 %v515, %v515
  %520 = vadd.xlane.f32.xlu0 %v516
  %v521 = vpop.xlane.xlu0 %520
  %522 = vadd.xlane.f32.xlu0 %v517
  %v523 = vpop.xlane.xlu0 %522
  %524 = vadd.xlane.f32.xlu0 %v518
  %v525 = vpop.xlane.xlu0 %524
  %526 = vadd.xlane.f32.xlu0 %v519
  %v527 = vpop.xlane.xlu0 %526
  %v528 = vadd.f32 %v521, %v523
  %v529 = vadd.f32 %v528, %v525
  %v530 = vadd.f32 %v529, %v527
  %v531 = vrot.slane %v530, 4
  %v532 = vadd.f32 %v530, %v531
  %v533 = vrot.slane %v532, 2
  %v534 = vadd.f32 %v532, %v533
  %v535 = vrot.slane %v534, 1
  %v536 = vadd.f32 %v534, %v535
  %v537 = vmul.f32 %v536, 0.0009765625
  %v538 = vadd.f32 %v537, 1e-05
  %v539 = vrsqrt.pop %v538
  %v540 = vmul.f32 %v539, %v538
  %v541 = vmul.f32 %v540, %v539
  %v542 = vmul.f32 0.5, %v541
  %v543 = vsub.f32 1.5, %v542
  %v544 = vmul.f32 %v539, %v543
  %vm545 = vweird.f32 %v538
  %vm546 = vweird.f32 %v539
  %vm547 = vmor %vm545, %vm546
  %v548 = vsel %vm547, %v539, %v544
  %v549 = vmul.f32 %v508, %v548
  %v550 = vmul.f32 %v509, %v548
  %v551 = vmul.f32 %v510, %v548
  %v552 = vmul.f32 %v511, %v548
  %v553 = vsel %vm482, %v549, %v462
  %v554 = vsel %vm483, %v550, %v463
  %v555 = vsel %vm484, %v551, %v464
  %v556 = vsel %vm485, %v552, %v465
  %vm557 = vmand %vm474, %vm385
  %vm558 = vmand %vm475, %vm385
  %vm559 = vmand %vm476, %vm385
  %vm560 = vmand %vm477, %vm385
  %vm561 = vmand %vm557, %vm390
  %vm562 = vmand %vm558, %vm390
  %vm563 = vmand %vm559, %vm390
  %vm564 = vmand %vm560, %vm390
  %v565 = vsel %vm561, %v276, 0.0
  %v566 = vsel %vm562, %v278, 0.0
  %v567 = vsel %vm563, %v281, 0.0
  %v568 = vsel %vm564, %v283, 0.0
  %569 = vadd.xlane.f32.xlu0 %v565
  %v570 = vpop.xlane.xlu0 %569
  %571 = vadd.xlane.f32.xlu0 %v566
  %v572 = vpop.xlane.xlu0 %571
  %573 = vadd.xlane.f32.xlu0 %v567
  %v574 = vpop.xlane.xlu0 %573
  %575 = vadd.xlane.f32.xlu0 %v568
  %v576 = vpop.xlane.xlu0 %575
  %v577 = vadd.f32 %v570, %v572
  %v578 = vadd.f32 %v577, %v574
  %v579 = vadd.f32 %v578, %v576
  %v580 = vrot.slane %v579, 4
  %v581 = vadd.f32 %v579, %v580
  %v582 = vrot.slane %v581, 2
  %v583 = vadd.f32 %v581, %v582
  %v584 = vrot.slane %v583, 1
  %v585 = vadd.f32 %v583, %v584
  %v586 = vmul.f32 %v585, 0.0009765625
  %v587 = vsub.f32 %v276, %v586
  %v588 = vsub.f32 %v278, %v586
  %v589 = vsub.f32 %v281, %v586
  %v590 = vsub.f32 %v283, %v586
  %v591 = vsel %vm561, %v587, 0.0
  %v592 = vsel %vm562, %v588, 0.0
  %v593 = vsel %vm563, %v589, 0.0
  %v594 = vsel %vm564, %v590, 0.0
  %v595 = vmul.f32 %v591, %v591
  %v596 = vmul.f32 %v592, %v592
  %v597 = vmul.f32 %v593, %v593
  %v598 = vmul.f32 %v594, %v594
  %599 = vadd.xlane.f32.xlu0 %v595
  %v600 = vpop.xlane.xlu0 %599
  %601 = vadd.xlane.f32.xlu0 %v596
  %v602 = vpop.xlane.xlu0 %601
  %603 = vadd.xlane.f32.xlu0 %v597
  %v604 = vpop.xlane.xlu0 %603
  %605 = vadd.xlane.f32.xlu0 %v598
  %v606 = vpop.xlane.xlu0 %605
  %v607 = vadd.f32 %v600, %v602
  %v608 = vadd.f32 %v607, %v604
  %v609 = vadd.f32 %v608, %v606
  %v610 = vrot.slane %v609, 4
  %v611 = vadd.f32 %v609, %v610
  %v612 = vrot.slane %v611, 2
  %v613 = vadd.f32 %v611, %v612
  %v614 = vrot.slane %v613, 1
  %v615 = vadd.f32 %v613, %v614
  %v616 = vmul.f32 %v615, 0.0009765625
  %v617 = vadd.f32 %v616, 1e-05
  %v618 = vrsqrt.pop %v617
  %v619 = vmul.f32 %v618, %v617
  %v620 = vmul.f32 %v619, %v618
  %v621 = vmul.f32 0.5, %v620
  %v622 = vsub.f32 1.5, %v621
  %v623 = vmul.f32 %v618, %v622
  %vm624 = vweird.f32 %v617
  %vm625 = vweird.f32 %v618
  %vm626 = vmor %vm624, %vm625
  %v627 = vsel %vm626, %v618, %v623
  %v628 = vmul.f32 %v587, %v627
  %v629 = vmul.f32 %v588, %v627
  %v630 = vmul.f32 %v589, %v627
  %v631 = vmul.f32 %v590, %v627
  %v632 = vsel %vm561, %v628, %v553
  %v633 = vsel %vm562, %v629, %v554
  %v634 = vsel %vm563, %v630, %v555
  %v635 = vsel %vm564, %v631, %v556
  %636 = vset.pattern.permute.xlu0 1
  %637 = vperm.xlu0 %636, %v59
  %v638 = vpop.permute.xlu0 %637
  %640 = vset.pattern.permute.xlu0 1
  %641 = vperm.xlu0 %640, %v60
  %v642 = vpop.permute.xlu0 %641
  %644 = vset.pattern.permute.xlu0 1
  %645 = vperm.xlu0 %644, %v61
  %v646 = vpop.permute.xlu0 %645
  %648 = vset.pattern.permute.xlu0 1
  %649 = vperm.xlu0 %648, %v62
  %v650 = vpop.permute.xlu0 %649
  %v652 = vmul.f32 %v632, %v638
  %v653 = vmul.f32 %v633, %v642
  %v654 = vmul.f32 %v634, %v646
  %v655 = vmul.f32 %v635, %v650
  %656 = vset.pattern.permute.xlu0 2
  %657 = vperm.xlu0 %656, %v59
  %v658 = vpop.permute.xlu0 %657
  %660 = vset.pattern.permute.xlu0 2
  %661 = vperm.xlu0 %660, %v60
  %v662 = vpop.permute.xlu0 %661
  %664 = vset.pattern.permute.xlu0 2
  %665 = vperm.xlu0 %664, %v61
  %v666 = vpop.permute.xlu0 %665
  %668 = vset.pattern.permute.xlu0 2
  %669 = vperm.xlu0 %668, %v62
  %v670 = vpop.permute.xlu0 %669
  %v672 = vadd.f32 %v652, %v658
  %v673 = vadd.f32 %v653, %v662
  %v674 = vadd.f32 %v654, %v666
  %v675 = vadd.f32 %v655, %v670
  %vm676 = vcmp.gt.f32.partialorder %v672, 0.0
  %vm677 = vcmp.gt.f32.partialorder %v673, 0.0
  %vm678 = vcmp.gt.f32.partialorder %v674, 0.0
  %vm679 = vcmp.gt.f32.partialorder %v675, 0.0
  %v680 = vmul.f32 %v672, 0.2
  %v681 = vmul.f32 %v673, 0.2
  %v682 = vmul.f32 %v674, 0.2
  %v683 = vmul.f32 %v675, 0.2
  %v684 = vsel %vm676, %v672, %v680
  %v685 = vsel %vm677, %v673, %v681
  %v686 = vsel %vm678, %v674, %v682
  %v687 = vsel %vm679, %v675, %v683
  %688 = vst [vmem:[%s3] sm:$0xff] %v684
  %689 = vst [vmem:[%s3 + $0x8] sm:$0xff] %v685
  %690 = vst [vmem:[%s3 + $0x10] sm:$0xff] %v686
  %691 = vst [vmem:[%s3 + $0x18] sm:$0xff] %v687
  // Predicated region
  $region14: #{_lambda_.5} parent=0 // pred_check
    _
  $region15: #{_lambda_.5} parent=0 // pred_check_branch
    %693 = sbr.rel (0) target = $region17
  $region16: #{_lambda_.5} parent=0 // pred_region
    _
  $region17: #{_lambda_.5} parent=0 // pred_fallthru
    _
  // Predicated region
  $region18: #{_lambda_.5} parent=0 // pred_check
    _
  $region19: #{_lambda_.5} parent=0 // pred_check_branch
    %695 = sbr.rel (0) target = $region21
  $region20: #{_lambda_.5} parent=0 // pred_region
    _
  $region21: #{_lambda_.5} parent=0 // pred_fallthru
    _

</llo_original>
